<compile_context>
chip_gen: v7x
topology: tpu7x:2x2x1
jax: 0.10.0
libtpu: 0.0.40
codegen_flags: <defaults>
</compile_context>

<pallas_src>
import jax
import jax.numpy as jnp
from jax.experimental import pallas as pl
from jax.experimental.pallas import tpu as pltpu

EMBED = 16
HIDDEN = 16
OUT = 8


def _lstm_model_kernel(emb_ref, wih0_ref, whh0_ref, b0_ref,
                       w1_ref, b1_ref, wlin_ref, blin_ref, out_ref):
    """emb_ref: (T*B, EMBED) time-major rows; out_ref: (B, OUT)."""
    H = HIDDEN
    B = out_ref.shape[0]
    T = emb_ref.shape[0] // B

    # ---- hoisted work (off the serial recurrence chain) --------------------
    # Layer-0 input projection for ALL timesteps in one MXU push, bias folded.
    x_proj = jnp.dot(emb_ref[...], wih0_ref[...],
                     preferred_element_type=jnp.float32) + b0_ref[...]
    whh0 = whh0_ref[...]                                 # (H, 4H)
    w1 = w1_ref[...]                                     # (2H, 4H) = [W_ih1; W_hh1]
    b1 = jnp.broadcast_to(b1_ref[...], (B, 4 * H))       # broadcast once, not per step

    def cell_elem(g, c):
        # Slab-wide sigmoid (tanh form: robust, single EUP pass over (B,4H)),
        # then cheap slices for i/f/o; tanh only on the g-gate slice.
        sig = 0.5 * jnp.tanh(0.5 * g) + 0.5
        i = sig[:, 0 * H:1 * H]
        f = sig[:, 1 * H:2 * H]
        o = sig[:, 3 * H:4 * H]
        gg = jnp.tanh(g[:, 2 * H:3 * H])
        c_new = f * c + i * gg
        h_new = o * jnp.tanh(c_new)
        return h_new, c_new

    zeros = jnp.zeros((B, H), jnp.float32)
    h0, c0, h1, c1, acc = zeros, zeros, zeros, zeros, zeros

    # ---- fully-unrolled recurrence (T static) -------------------------------
    for t in range(T):
        # Layer 0: only the recurrent matmul remains on the serial chain.
        g0 = x_proj[t * B:(t + 1) * B, :] + jnp.dot(
            h0, whh0, preferred_element_type=jnp.float32)
        h0, c0 = cell_elem(g0, c0)

        # Layer 1: fused [h0, h1] @ [W_ih1; W_hh1] -> one MXU push per step.
        g1 = jnp.dot(jnp.concatenate([h0, h1], axis=1), w1,
                     preferred_element_type=jnp.float32) + b1
        h1, c1 = cell_elem(g1, c1)

        acc = acc + h1                                   # running sum over time

    logits = jnp.dot(acc, wlin_ref[...],
                     preferred_element_type=jnp.float32) + blin_ref[...]
    out_ref[...] = jnp.maximum(logits, 0.0)              # ReLU


def lstm_model_forward(tokens, params):
    # Embedding lookup (padding_idx=0 handled by zero row 0) is plain-JAX glue.
    emb = params["embed"][tokens]                                    # (B, T, E)
    B, T, _ = emb.shape
    emb_tm = jnp.transpose(emb, (1, 0, 2)).reshape(T * B, EMBED)     # time-major rows
    emb_tm = emb_tm.astype(jnp.float32)
    # Pre-concatenate layer-1 weights once: [W_ih1; W_hh1] -> (2H, 4H).
    w1 = jnp.concatenate([params["wih1"], params["whh1"]], axis=0)

    # Gridless call: every operand DMA'd once into VMEM, no pipeline prologue.
    # TODO(synk): for large B on v7x, add a batch-shard grid axis with
    # dimension_semantics=("parallel",) so both TensorCores run a recurrence.
    def vmem():
        return pl.BlockSpec(memory_space=pltpu.MemorySpace.VMEM)

    return pl.pallas_call(
        _lstm_model_kernel,
        in_specs=[vmem() for _ in range(8)],
        out_specs=vmem(),
        out_shape=jax.ShapeDtypeStruct((B, OUT), jnp.float32),
    )(emb_tm,
      params["wih0"], params["whh0"], params["b0"],
      w1, params["b1"],
      params["wlin"], params["blin"])


def reference_forward(tokens, params):
    """Pure-JAX reference matching PyTorch LSTM semantics (i,f,g,o gates)."""
    emb = params["embed"][tokens]
    B, T, _ = emb.shape
    H = HIDDEN

    def cell(x_t, h, c, wih, whh, b):
        g = x_t @ wih + h @ whh + b
        i = jax.nn.sigmoid(g[:, :H])
        f = jax.nn.sigmoid(g[:, H:2 * H])
        gg = jnp.tanh(g[:, 2 * H:3 * H])
        o = jax.nn.sigmoid(g[:, 3 * H:])
        c = f * c + i * gg
        return o * jnp.tanh(c), c

    h0 = c0 = h1 = c1 = jnp.zeros((B, H), jnp.float32)
    acc = jnp.zeros((B, H), jnp.float32)
    for t in range(T):
        h0, c0 = cell(emb[:, t], h0, c0, params["wih0"], params["whh0"], params["b0"])
        h1, c1 = cell(h0, h1, c1, params["wih1"], params["whh1"], params["b1"])
        acc = acc + h1
    return jnp.maximum(acc @ params["wlin"] + params["blin"], 0.0)


if __name__ == "__main__":
    key = jax.random.PRNGKey(0)
    vocab_size = 32
    B, T = 4, 8

    keys = jax.random.split(key, 12)
    bound = 1.0 / float(jnp.sqrt(jnp.float32(HIDDEN)))

    def u(k, shape):
        return jax.random.uniform(k, shape, jnp.float32, -bound, bound)

    embed = jax.random.normal(keys[0], (vocab_size, EMBED), jnp.float32)
    embed = embed.at[0].set(0.0)  # padding_idx=0

    params = dict(
        embed=embed,
        wih0=u(keys[1], (EMBED, 4 * HIDDEN)),
        whh0=u(keys[2], (HIDDEN, 4 * HIDDEN)),
        b0=u(keys[3], (1, 4 * HIDDEN)) + u(keys[4], (1, 4 * HIDDEN)),   # b_ih + b_hh
        wih1=u(keys[5], (HIDDEN, 4 * HIDDEN)),
        whh1=u(keys[6], (HIDDEN, 4 * HIDDEN)),
        b1=u(keys[7], (1, 4 * HIDDEN)) + u(keys[8], (1, 4 * HIDDEN)),
        wlin=u(keys[9], (HIDDEN, OUT)),
        blin=u(keys[10], (1, OUT)),
    )

    tokens = jax.random.randint(keys[11], (B, T), 0, vocab_size, dtype=jnp.int32)

    out = lstm_model_forward(tokens, params)
    out = jax.block_until_ready(out)

    ref = reference_forward(tokens, params)
    assert out.shape == (B, OUT)
    assert jnp.allclose(out, ref, atol=2e-5, rtol=2e-5), (out, ref)
    print("KERNEL_OK")
</pallas_src>

<mosaic_0001>
module attributes {stable_mosaic.version = 11 : i64} {
  func.func @_lstm_model_kernel(%arg0: memref<32x16xf32, #tpu.memory_space<vmem>>, %arg1: memref<16x64xf32, #tpu.memory_space<vmem>>, %arg2: memref<16x64xf32, #tpu.memory_space<vmem>>, %arg3: memref<1x64xf32, #tpu.memory_space<vmem>>, %arg4: memref<32x64xf32, #tpu.memory_space<vmem>>, %arg5: memref<1x64xf32, #tpu.memory_space<vmem>>, %arg6: memref<16x8xf32, #tpu.memory_space<vmem>>, %arg7: memref<1x8xf32, #tpu.memory_space<vmem>>, %arg8: memref<4x8xf32, #tpu.memory_space<vmem>>) attributes {dimension_semantics = [], scalar_prefetch = 0 : i64, scratch_operands = 0 : i64, tpu.core_type = #tpu.core_type<tc>} {
    %c0 = arith.constant 0 : index
    %c0_0 = arith.constant 0 : index
    %0 = vector.load %arg0[%c0, %c0_0] : memref<32x16xf32, #tpu.memory_space<vmem>>, vector<32x16xf32>
    %c0_1 = arith.constant 0 : index
    %c0_2 = arith.constant 0 : index
    %1 = vector.load %arg1[%c0_1, %c0_2] : memref<16x64xf32, #tpu.memory_space<vmem>>, vector<16x64xf32>
    %cst = arith.constant dense<0.000000e+00> : vector<32x64xf32>
    %2 = tpu.matmul %0, %1, %cst {dimension_numbers = #tpu.dot_dimension_numbers<[1], [0], [0], [1], [0, 0, 1, 1], [], []>} : vector<32x16xf32>, vector<16x64xf32>, vector<32x64xf32> -> vector<32x64xf32>
    %c0_3 = arith.constant 0 : index
    %c0_4 = arith.constant 0 : index
    %3 = vector.load %arg3[%c0_3, %c0_4] : memref<1x64xf32, #tpu.memory_space<vmem>>, vector<1x64xf32>
    %4 = vector.broadcast %3 : vector<1x64xf32> to vector<32x64xf32>
    %5 = arith.addf %2, %4 : vector<32x64xf32>
    %c0_5 = arith.constant 0 : index
    %c0_6 = arith.constant 0 : index
    %6 = vector.load %arg2[%c0_5, %c0_6] : memref<16x64xf32, #tpu.memory_space<vmem>>, vector<16x64xf32>
    %c0_7 = arith.constant 0 : index
    %c0_8 = arith.constant 0 : index
    %7 = vector.load %arg4[%c0_7, %c0_8] : memref<32x64xf32, #tpu.memory_space<vmem>>, vector<32x64xf32>
    %c0_9 = arith.constant 0 : index
    %c0_10 = arith.constant 0 : index
    %8 = vector.load %arg5[%c0_9, %c0_10] : memref<1x64xf32, #tpu.memory_space<vmem>>, vector<1x64xf32>
    %9 = vector.shape_cast %8 : vector<1x64xf32> to vector<1x64xf32>
    %10 = vector.broadcast %9 : vector<1x64xf32> to vector<4x64xf32>
    %cst_11 = arith.constant 0.000000e+00 : f32
    %11 = vector.broadcast %cst_11 : f32 to vector<4x16xf32>
    %12 = vector.extract_strided_slice %5 {offsets = [0, 0], sizes = [4, 64], strides = [1, 1]} : vector<32x64xf32> to vector<4x64xf32>
    %cst_12 = arith.constant dense<0.000000e+00> : vector<4x64xf32>
    %13 = tpu.matmul %11, %6, %cst_12 {dimension_numbers = #tpu.dot_dimension_numbers<[1], [0], [0], [1], [0, 0, 1, 1], [], []>} : vector<4x16xf32>, vector<16x64xf32>, vector<4x64xf32> -> vector<4x64xf32>
    %14 = arith.addf %12, %13 : vector<4x64xf32>
    %cst_13 = arith.constant 5.000000e-01 : f32
    %15 = vector.broadcast %cst_13 : f32 to vector<4x64xf32>
    %16 = arith.mulf %15, %14 : vector<4x64xf32>
    %17 = math.tanh %16 : vector<4x64xf32>
    %cst_14 = arith.constant 5.000000e-01 : f32
    %18 = vector.broadcast %cst_14 : f32 to vector<4x64xf32>
    %19 = arith.mulf %18, %17 : vector<4x64xf32>
    %cst_15 = arith.constant 5.000000e-01 : f32
    %20 = vector.broadcast %cst_15 : f32 to vector<4x64xf32>
    %21 = arith.addf %19, %20 : vector<4x64xf32>
    %22 = vector.extract_strided_slice %21 {offsets = [0, 0], sizes = [4, 16], strides = [1, 1]} : vector<4x64xf32> to vector<4x16xf32>
    %23 = vector.extract_strided_slice %21 {offsets = [0, 16], sizes = [4, 16], strides = [1, 1]} : vector<4x64xf32> to vector<4x16xf32>
    %24 = vector.extract_strided_slice %21 {offsets = [0, 48], sizes = [4, 16], strides = [1, 1]} : vector<4x64xf32> to vector<4x16xf32>
    %25 = vector.extract_strided_slice %14 {offsets = [0, 32], sizes = [4, 16], strides = [1, 1]} : vector<4x64xf32> to vector<4x16xf32>
    %26 = math.tanh %25 : vector<4x16xf32>
    %27 = arith.mulf %23, %11 : vector<4x16xf32>
    %28 = arith.mulf %22, %26 : vector<4x16xf32>
    %29 = arith.addf %27, %28 : vector<4x16xf32>
    %30 = math.tanh %29 : vector<4x16xf32>
    %31 = arith.mulf %24, %30 : vector<4x16xf32>
    %32 = tpu.concatenate %31, %11 in 1 : vector<4x16xf32>, vector<4x16xf32> -> vector<4x32xf32>
    %cst_16 = arith.constant dense<0.000000e+00> : vector<4x64xf32>
    %33 = tpu.matmul %32, %7, %cst_16 {dimension_numbers = #tpu.dot_dimension_numbers<[1], [0], [0], [1], [0, 0, 1, 1], [], []>} : vector<4x32xf32>, vector<32x64xf32>, vector<4x64xf32> -> vector<4x64xf32>
    %34 = arith.addf %33, %10 : vector<4x64xf32>
    %cst_17 = arith.constant 5.000000e-01 : f32
    %35 = vector.broadcast %cst_17 : f32 to vector<4x64xf32>
    %36 = arith.mulf %35, %34 : vector<4x64xf32>
    %37 = math.tanh %36 : vector<4x64xf32>
    %cst_18 = arith.constant 5.000000e-01 : f32
    %38 = vector.broadcast %cst_18 : f32 to vector<4x64xf32>
    %39 = arith.mulf %38, %37 : vector<4x64xf32>
    %cst_19 = arith.constant 5.000000e-01 : f32
    %40 = vector.broadcast %cst_19 : f32 to vector<4x64xf32>
    %41 = arith.addf %39, %40 : vector<4x64xf32>
    %42 = vector.extract_strided_slice %41 {offsets = [0, 0], sizes = [4, 16], strides = [1, 1]} : vector<4x64xf32> to vector<4x16xf32>
    %43 = vector.extract_strided_slice %41 {offsets = [0, 16], sizes = [4, 16], strides = [1, 1]} : vector<4x64xf32> to vector<4x16xf32>
    %44 = vector.extract_strided_slice %41 {offsets = [0, 48], sizes = [4, 16], strides = [1, 1]} : vector<4x64xf32> to vector<4x16xf32>
    %45 = vector.extract_strided_slice %34 {offsets = [0, 32], sizes = [4, 16], strides = [1, 1]} : vector<4x64xf32> to vector<4x16xf32>
    %46 = math.tanh %45 : vector<4x16xf32>
    %47 = arith.mulf %43, %11 : vector<4x16xf32>
    %48 = arith.mulf %42, %46 : vector<4x16xf32>
    %49 = arith.addf %47, %48 : vector<4x16xf32>
    %50 = math.tanh %49 : vector<4x16xf32>
    %51 = arith.mulf %44, %50 : vector<4x16xf32>
    %52 = arith.addf %11, %51 : vector<4x16xf32>
    %53 = vector.extract_strided_slice %5 {offsets = [4, 0], sizes = [4, 64], strides = [1, 1]} : vector<32x64xf32> to vector<4x64xf32>
    %cst_20 = arith.constant dense<0.000000e+00> : vector<4x64xf32>
    %54 = tpu.matmul %31, %6, %cst_20 {dimension_numbers = #tpu.dot_dimension_numbers<[1], [0], [0], [1], [0, 0, 1, 1], [], []>} : vector<4x16xf32>, vector<16x64xf32>, vector<4x64xf32> -> vector<4x64xf32>
    %55 = arith.addf %53, %54 : vector<4x64xf32>
    %cst_21 = arith.constant 5.000000e-01 : f32
    %56 = vector.broadcast %cst_21 : f32 to vector<4x64xf32>
    %57 = arith.mulf %56, %55 : vector<4x64xf32>
    %58 = math.tanh %57 : vector<4x64xf32>
    %cst_22 = arith.constant 5.000000e-01 : f32
    %59 = vector.broadcast %cst_22 : f32 to vector<4x64xf32>
    %60 = arith.mulf %59, %58 : vector<4x64xf32>
    %cst_23 = arith.constant 5.000000e-01 : f32
    %61 = vector.broadcast %cst_23 : f32 to vector<4x64xf32>
    %62 = arith.addf %60, %61 : vector<4x64xf32>
    %63 = vector.extract_strided_slice %62 {offsets = [0, 0], sizes = [4, 16], strides = [1, 1]} : vector<4x64xf32> to vector<4x16xf32>
    %64 = vector.extract_strided_slice %62 {offsets = [0, 16], sizes = [4, 16], strides = [1, 1]} : vector<4x64xf32> to vector<4x16xf32>
    %65 = vector.extract_strided_slice %62 {offsets = [0, 48], sizes = [4, 16], strides = [1, 1]} : vector<4x64xf32> to vector<4x16xf32>
    %66 = vector.extract_strided_slice %55 {offsets = [0, 32], sizes = [4, 16], strides = [1, 1]} : vector<4x64xf32> to vector<4x16xf32>
    %67 = math.tanh %66 : vector<4x16xf32>
    %68 = arith.mulf %64, %29 : vector<4x16xf32>
    %69 = arith.mulf %63, %67 : vector<4x16xf32>
    %70 = arith.addf %68, %69 : vector<4x16xf32>
    %71 = math.tanh %70 : vector<4x16xf32>
    %72 = arith.mulf %65, %71 : vector<4x16xf32>
    %73 = tpu.concatenate %72, %51 in 1 : vector<4x16xf32>, vector<4x16xf32> -> vector<4x32xf32>
    %cst_24 = arith.constant dense<0.000000e+00> : vector<4x64xf32>
    %74 = tpu.matmul %73, %7, %cst_24 {dimension_numbers = #tpu.dot_dimension_numbers<[1], [0], [0], [1], [0, 0, 1, 1], [], []>} : vector<4x32xf32>, vector<32x64xf32>, vector<4x64xf32> -> vector<4x64xf32>
    %75 = arith.addf %74, %10 : vector<4x64xf32>
    %cst_25 = arith.constant 5.000000e-01 : f32
    %76 = vector.broadcast %cst_25 : f32 to vector<4x64xf32>
    %77 = arith.mulf %76, %75 : vector<4x64xf32>
    %78 = math.tanh %77 : vector<4x64xf32>
    %cst_26 = arith.constant 5.000000e-01 : f32
    %79 = vector.broadcast %cst_26 : f32 to vector<4x64xf32>
    %80 = arith.mulf %79, %78 : vector<4x64xf32>
    %cst_27 = arith.constant 5.000000e-01 : f32
    %81 = vector.broadcast %cst_27 : f32 to vector<4x64xf32>
    %82 = arith.addf %80, %81 : vector<4x64xf32>
    %83 = vector.extract_strided_slice %82 {offsets = [0, 0], sizes = [4, 16], strides = [1, 1]} : vector<4x64xf32> to vector<4x16xf32>
    %84 = vector.extract_strided_slice %82 {offsets = [0, 16], sizes = [4, 16], strides = [1, 1]} : vector<4x64xf32> to vector<4x16xf32>
    %85 = vector.extract_strided_slice %82 {offsets = [0, 48], sizes = [4, 16], strides = [1, 1]} : vector<4x64xf32> to vector<4x16xf32>
    %86 = vector.extract_strided_slice %75 {offsets = [0, 32], sizes = [4, 16], strides = [1, 1]} : vector<4x64xf32> to vector<4x16xf32>
    %87 = math.tanh %86 : vector<4x16xf32>
    %88 = arith.mulf %84, %49 : vector<4x16xf32>
    %89 = arith.mulf %83, %87 : vector<4x16xf32>
    %90 = arith.addf %88, %89 : vector<4x16xf32>
    %91 = math.tanh %90 : vector<4x16xf32>
    %92 = arith.mulf %85, %91 : vector<4x16xf32>
    %93 = arith.addf %52, %92 : vector<4x16xf32>
    %94 = vector.extract_strided_slice %5 {offsets = [8, 0], sizes = [4, 64], strides = [1, 1]} : vector<32x64xf32> to vector<4x64xf32>
    %cst_28 = arith.constant dense<0.000000e+00> : vector<4x64xf32>
    %95 = tpu.matmul %72, %6, %cst_28 {dimension_numbers = #tpu.dot_dimension_numbers<[1], [0], [0], [1], [0, 0, 1, 1], [], []>} : vector<4x16xf32>, vector<16x64xf32>, vector<4x64xf32> -> vector<4x64xf32>
    %96 = arith.addf %94, %95 : vector<4x64xf32>
    %cst_29 = arith.constant 5.000000e-01 : f32
    %97 = vector.broadcast %cst_29 : f32 to vector<4x64xf32>
    %98 = arith.mulf %97, %96 : vector<4x64xf32>
    %99 = math.tanh %98 : vector<4x64xf32>
    %cst_30 = arith.constant 5.000000e-01 : f32
    %100 = vector.broadcast %cst_30 : f32 to vector<4x64xf32>
    %101 = arith.mulf %100, %99 : vector<4x64xf32>
    %cst_31 = arith.constant 5.000000e-01 : f32
    %102 = vector.broadcast %cst_31 : f32 to vector<4x64xf32>
    %103 = arith.addf %101, %102 : vector<4x64xf32>
    %104 = vector.extract_strided_slice %103 {offsets = [0, 0], sizes = [4, 16], strides = [1, 1]} : vector<4x64xf32> to vector<4x16xf32>
    %105 = vector.extract_strided_slice %103 {offsets = [0, 16], sizes = [4, 16], strides = [1, 1]} : vector<4x64xf32> to vector<4x16xf32>
    %106 = vector.extract_strided_slice %103 {offsets = [0, 48], sizes = [4, 16], strides = [1, 1]} : vector<4x64xf32> to vector<4x16xf32>
    %107 = vector.extract_strided_slice %96 {offsets = [0, 32], sizes = [4, 16], strides = [1, 1]} : vector<4x64xf32> to vector<4x16xf32>
    %108 = math.tanh %107 : vector<4x16xf32>
    %109 = arith.mulf %105, %70 : vector<4x16xf32>
    %110 = arith.mulf %104, %108 : vector<4x16xf32>
    %111 = arith.addf %109, %110 : vector<4x16xf32>
    %112 = math.tanh %111 : vector<4x16xf32>
    %113 = arith.mulf %106, %112 : vector<4x16xf32>
    %114 = tpu.concatenate %113, %92 in 1 : vector<4x16xf32>, vector<4x16xf32> -> vector<4x32xf32>
    %cst_32 = arith.constant dense<0.000000e+00> : vector<4x64xf32>
    %115 = tpu.matmul %114, %7, %cst_32 {dimension_numbers = #tpu.dot_dimension_numbers<[1], [0], [0], [1], [0, 0, 1, 1], [], []>} : vector<4x32xf32>, vector<32x64xf32>, vector<4x64xf32> -> vector<4x64xf32>
    %116 = arith.addf %115, %10 : vector<4x64xf32>
    %cst_33 = arith.constant 5.000000e-01 : f32
    %117 = vector.broadcast %cst_33 : f32 to vector<4x64xf32>
    %118 = arith.mulf %117, %116 : vector<4x64xf32>
    %119 = math.tanh %118 : vector<4x64xf32>
    %cst_34 = arith.constant 5.000000e-01 : f32
    %120 = vector.broadcast %cst_34 : f32 to vector<4x64xf32>
    %121 = arith.mulf %120, %119 : vector<4x64xf32>
    %cst_35 = arith.constant 5.000000e-01 : f32
    %122 = vector.broadcast %cst_35 : f32 to vector<4x64xf32>
    %123 = arith.addf %121, %122 : vector<4x64xf32>
    %124 = vector.extract_strided_slice %123 {offsets = [0, 0], sizes = [4, 16], strides = [1, 1]} : vector<4x64xf32> to vector<4x16xf32>
    %125 = vector.extract_strided_slice %123 {offsets = [0, 16], sizes = [4, 16], strides = [1, 1]} : vector<4x64xf32> to vector<4x16xf32>
    %126 = vector.extract_strided_slice %123 {offsets = [0, 48], sizes = [4, 16], strides = [1, 1]} : vector<4x64xf32> to vector<4x16xf32>
    %127 = vector.extract_strided_slice %116 {offsets = [0, 32], sizes = [4, 16], strides = [1, 1]} : vector<4x64xf32> to vector<4x16xf32>
    %128 = math.tanh %127 : vector<4x16xf32>
    %129 = arith.mulf %125, %90 : vector<4x16xf32>
    %130 = arith.mulf %124, %128 : vector<4x16xf32>
    %131 = arith.addf %129, %130 : vector<4x16xf32>
    %132 = math.tanh %131 : vector<4x16xf32>
    %133 = arith.mulf %126, %132 : vector<4x16xf32>
    %134 = arith.addf %93, %133 : vector<4x16xf32>
    %135 = vector.extract_strided_slice %5 {offsets = [12, 0], sizes = [4, 64], strides = [1, 1]} : vector<32x64xf32> to vector<4x64xf32>
    %cst_36 = arith.constant dense<0.000000e+00> : vector<4x64xf32>
    %136 = tpu.matmul %113, %6, %cst_36 {dimension_numbers = #tpu.dot_dimension_numbers<[1], [0], [0], [1], [0, 0, 1, 1], [], []>} : vector<4x16xf32>, vector<16x64xf32>, vector<4x64xf32> -> vector<4x64xf32>
    %137 = arith.addf %135, %136 : vector<4x64xf32>
    %cst_37 = arith.constant 5.000000e-01 : f32
    %138 = vector.broadcast %cst_37 : f32 to vector<4x64xf32>
    %139 = arith.mulf %138, %137 : vector<4x64xf32>
    %140 = math.tanh %139 : vector<4x64xf32>
    %cst_38 = arith.constant 5.000000e-01 : f32
    %141 = vector.broadcast %cst_38 : f32 to vector<4x64xf32>
    %142 = arith.mulf %141, %140 : vector<4x64xf32>
    %cst_39 = arith.constant 5.000000e-01 : f32
    %143 = vector.broadcast %cst_39 : f32 to vector<4x64xf32>
    %144 = arith.addf %142, %143 : vector<4x64xf32>
    %145 = vector.extract_strided_slice %144 {offsets = [0, 0], sizes = [4, 16], strides = [1, 1]} : vector<4x64xf32> to vector<4x16xf32>
    %146 = vector.extract_strided_slice %144 {offsets = [0, 16], sizes = [4, 16], strides = [1, 1]} : vector<4x64xf32> to vector<4x16xf32>
    %147 = vector.extract_strided_slice %144 {offsets = [0, 48], sizes = [4, 16], strides = [1, 1]} : vector<4x64xf32> to vector<4x16xf32>
    %148 = vector.extract_strided_slice %137 {offsets = [0, 32], sizes = [4, 16], strides = [1, 1]} : vector<4x64xf32> to vector<4x16xf32>
    %149 = math.tanh %148 : vector<4x16xf32>
    %150 = arith.mulf %146, %111 : vector<4x16xf32>
    %151 = arith.mulf %145, %149 : vector<4x16xf32>
    %152 = arith.addf %150, %151 : vector<4x16xf32>
    %153 = math.tanh %152 : vector<4x16xf32>
    %154 = arith.mulf %147, %153 : vector<4x16xf32>
    %155 = tpu.concatenate %154, %133 in 1 : vector<4x16xf32>, vector<4x16xf32> -> vector<4x32xf32>
    %cst_40 = arith.constant dense<0.000000e+00> : vector<4x64xf32>
    %156 = tpu.matmul %155, %7, %cst_40 {dimension_numbers = #tpu.dot_dimension_numbers<[1], [0], [0], [1], [0, 0, 1, 1], [], []>} : vector<4x32xf32>, vector<32x64xf32>, vector<4x64xf32> -> vector<4x64xf32>
    %157 = arith.addf %156, %10 : vector<4x64xf32>
    %cst_41 = arith.constant 5.000000e-01 : f32
    %158 = vector.broadcast %cst_41 : f32 to vector<4x64xf32>
    %159 = arith.mulf %158, %157 : vector<4x64xf32>
    %160 = math.tanh %159 : vector<4x64xf32>
    %cst_42 = arith.constant 5.000000e-01 : f32
    %161 = vector.broadcast %cst_42 : f32 to vector<4x64xf32>
    %162 = arith.mulf %161, %160 : vector<4x64xf32>
    %cst_43 = arith.constant 5.000000e-01 : f32
    %163 = vector.broadcast %cst_43 : f32 to vector<4x64xf32>
    %164 = arith.addf %162, %163 : vector<4x64xf32>
    %165 = vector.extract_strided_slice %164 {offsets = [0, 0], sizes = [4, 16], strides = [1, 1]} : vector<4x64xf32> to vector<4x16xf32>
    %166 = vector.extract_strided_slice %164 {offsets = [0, 16], sizes = [4, 16], strides = [1, 1]} : vector<4x64xf32> to vector<4x16xf32>
    %167 = vector.extract_strided_slice %164 {offsets = [0, 48], sizes = [4, 16], strides = [1, 1]} : vector<4x64xf32> to vector<4x16xf32>
    %168 = vector.extract_strided_slice %157 {offsets = [0, 32], sizes = [4, 16], strides = [1, 1]} : vector<4x64xf32> to vector<4x16xf32>
    %169 = math.tanh %168 : vector<4x16xf32>
    %170 = arith.mulf %166, %131 : vector<4x16xf32>
    %171 = arith.mulf %165, %169 : vector<4x16xf32>
    %172 = arith.addf %170, %171 : vector<4x16xf32>
    %173 = math.tanh %172 : vector<4x16xf32>
    %174 = arith.mulf %167, %173 : vector<4x16xf32>
    %175 = arith.addf %134, %174 : vector<4x16xf32>
    %176 = vector.extract_strided_slice %5 {offsets = [16, 0], sizes = [4, 64], strides = [1, 1]} : vector<32x64xf32> to vector<4x64xf32>
    %cst_44 = arith.constant dense<0.000000e+00> : vector<4x64xf32>
    %177 = tpu.matmul %154, %6, %cst_44 {dimension_numbers = #tpu.dot_dimension_numbers<[1], [0], [0], [1], [0, 0, 1, 1], [], []>} : vector<4x16xf32>, vector<16x64xf32>, vector<4x64xf32> -> vector<4x64xf32>
    %178 = arith.addf %176, %177 : vector<4x64xf32>
    %cst_45 = arith.constant 5.000000e-01 : f32
    %179 = vector.broadcast %cst_45 : f32 to vector<4x64xf32>
    %180 = arith.mulf %179, %178 : vector<4x64xf32>
    %181 = math.tanh %180 : vector<4x64xf32>
    %cst_46 = arith.constant 5.000000e-01 : f32
    %182 = vector.broadcast %cst_46 : f32 to vector<4x64xf32>
    %183 = arith.mulf %182, %181 : vector<4x64xf32>
    %cst_47 = arith.constant 5.000000e-01 : f32
    %184 = vector.broadcast %cst_47 : f32 to vector<4x64xf32>
    %185 = arith.addf %183, %184 : vector<4x64xf32>
    %186 = vector.extract_strided_slice %185 {offsets = [0, 0], sizes = [4, 16], strides = [1, 1]} : vector<4x64xf32> to vector<4x16xf32>
    %187 = vector.extract_strided_slice %185 {offsets = [0, 16], sizes = [4, 16], strides = [1, 1]} : vector<4x64xf32> to vector<4x16xf32>
    %188 = vector.extract_strided_slice %185 {offsets = [0, 48], sizes = [4, 16], strides = [1, 1]} : vector<4x64xf32> to vector<4x16xf32>
    %189 = vector.extract_strided_slice %178 {offsets = [0, 32], sizes = [4, 16], strides = [1, 1]} : vector<4x64xf32> to vector<4x16xf32>
    %190 = math.tanh %189 : vector<4x16xf32>
    %191 = arith.mulf %187, %152 : vector<4x16xf32>
    %192 = arith.mulf %186, %190 : vector<4x16xf32>
    %193 = arith.addf %191, %192 : vector<4x16xf32>
    %194 = math.tanh %193 : vector<4x16xf32>
    %195 = arith.mulf %188, %194 : vector<4x16xf32>
    %196 = tpu.concatenate %195, %174 in 1 : vector<4x16xf32>, vector<4x16xf32> -> vector<4x32xf32>
    %cst_48 = arith.constant dense<0.000000e+00> : vector<4x64xf32>
    %197 = tpu.matmul %196, %7, %cst_48 {dimension_numbers = #tpu.dot_dimension_numbers<[1], [0], [0], [1], [0, 0, 1, 1], [], []>} : vector<4x32xf32>, vector<32x64xf32>, vector<4x64xf32> -> vector<4x64xf32>
    %198 = arith.addf %197, %10 : vector<4x64xf32>
    %cst_49 = arith.constant 5.000000e-01 : f32
    %199 = vector.broadcast %cst_49 : f32 to vector<4x64xf32>
    %200 = arith.mulf %199, %198 : vector<4x64xf32>
    %201 = math.tanh %200 : vector<4x64xf32>
    %cst_50 = arith.constant 5.000000e-01 : f32
    %202 = vector.broadcast %cst_50 : f32 to vector<4x64xf32>
    %203 = arith.mulf %202, %201 : vector<4x64xf32>
    %cst_51 = arith.constant 5.000000e-01 : f32
    %204 = vector.broadcast %cst_51 : f32 to vector<4x64xf32>
    %205 = arith.addf %203, %204 : vector<4x64xf32>
    %206 = vector.extract_strided_slice %205 {offsets = [0, 0], sizes = [4, 16], strides = [1, 1]} : vector<4x64xf32> to vector<4x16xf32>
    %207 = vector.extract_strided_slice %205 {offsets = [0, 16], sizes = [4, 16], strides = [1, 1]} : vector<4x64xf32> to vector<4x16xf32>
    %208 = vector.extract_strided_slice %205 {offsets = [0, 48], sizes = [4, 16], strides = [1, 1]} : vector<4x64xf32> to vector<4x16xf32>
    %209 = vector.extract_strided_slice %198 {offsets = [0, 32], sizes = [4, 16], strides = [1, 1]} : vector<4x64xf32> to vector<4x16xf32>
    %210 = math.tanh %209 : vector<4x16xf32>
    %211 = arith.mulf %207, %172 : vector<4x16xf32>
    %212 = arith.mulf %206, %210 : vector<4x16xf32>
    %213 = arith.addf %211, %212 : vector<4x16xf32>
    %214 = math.tanh %213 : vector<4x16xf32>
    %215 = arith.mulf %208, %214 : vector<4x16xf32>
    %216 = arith.addf %175, %215 : vector<4x16xf32>
    %217 = vector.extract_strided_slice %5 {offsets = [20, 0], sizes = [4, 64], strides = [1, 1]} : vector<32x64xf32> to vector<4x64xf32>
    %cst_52 = arith.constant dense<0.000000e+00> : vector<4x64xf32>
    %218 = tpu.matmul %195, %6, %cst_52 {dimension_numbers = #tpu.dot_dimension_numbers<[1], [0], [0], [1], [0, 0, 1, 1], [], []>} : vector<4x16xf32>, vector<16x64xf32>, vector<4x64xf32> -> vector<4x64xf32>
    %219 = arith.addf %217, %218 : vector<4x64xf32>
    %cst_53 = arith.constant 5.000000e-01 : f32
    %220 = vector.broadcast %cst_53 : f32 to vector<4x64xf32>
    %221 = arith.mulf %220, %219 : vector<4x64xf32>
    %222 = math.tanh %221 : vector<4x64xf32>
    %cst_54 = arith.constant 5.000000e-01 : f32
    %223 = vector.broadcast %cst_54 : f32 to vector<4x64xf32>
    %224 = arith.mulf %223, %222 : vector<4x64xf32>
    %cst_55 = arith.constant 5.000000e-01 : f32
    %225 = vector.broadcast %cst_55 : f32 to vector<4x64xf32>
    %226 = arith.addf %224, %225 : vector<4x64xf32>
    %227 = vector.extract_strided_slice %226 {offsets = [0, 0], sizes = [4, 16], strides = [1, 1]} : vector<4x64xf32> to vector<4x16xf32>
    %228 = vector.extract_strided_slice %226 {offsets = [0, 16], sizes = [4, 16], strides = [1, 1]} : vector<4x64xf32> to vector<4x16xf32>
    %229 = vector.extract_strided_slice %226 {offsets = [0, 48], sizes = [4, 16], strides = [1, 1]} : vector<4x64xf32> to vector<4x16xf32>
    %230 = vector.extract_strided_slice %219 {offsets = [0, 32], sizes = [4, 16], strides = [1, 1]} : vector<4x64xf32> to vector<4x16xf32>
    %231 = math.tanh %230 : vector<4x16xf32>
    %232 = arith.mulf %228, %193 : vector<4x16xf32>
    %233 = arith.mulf %227, %231 : vector<4x16xf32>
    %234 = arith.addf %232, %233 : vector<4x16xf32>
    %235 = math.tanh %234 : vector<4x16xf32>
    %236 = arith.mulf %229, %235 : vector<4x16xf32>
    %237 = tpu.concatenate %236, %215 in 1 : vector<4x16xf32>, vector<4x16xf32> -> vector<4x32xf32>
    %cst_56 = arith.constant dense<0.000000e+00> : vector<4x64xf32>
    %238 = tpu.matmul %237, %7, %cst_56 {dimension_numbers = #tpu.dot_dimension_numbers<[1], [0], [0], [1], [0, 0, 1, 1], [], []>} : vector<4x32xf32>, vector<32x64xf32>, vector<4x64xf32> -> vector<4x64xf32>
    %239 = arith.addf %238, %10 : vector<4x64xf32>
    %cst_57 = arith.constant 5.000000e-01 : f32
    %240 = vector.broadcast %cst_57 : f32 to vector<4x64xf32>
    %241 = arith.mulf %240, %239 : vector<4x64xf32>
    %242 = math.tanh %241 : vector<4x64xf32>
    %cst_58 = arith.constant 5.000000e-01 : f32
    %243 = vector.broadcast %cst_58 : f32 to vector<4x64xf32>
    %244 = arith.mulf %243, %242 : vector<4x64xf32>
    %cst_59 = arith.constant 5.000000e-01 : f32
    %245 = vector.broadcast %cst_59 : f32 to vector<4x64xf32>
    %246 = arith.addf %244, %245 : vector<4x64xf32>
    %247 = vector.extract_strided_slice %246 {offsets = [0, 0], sizes = [4, 16], strides = [1, 1]} : vector<4x64xf32> to vector<4x16xf32>
    %248 = vector.extract_strided_slice %246 {offsets = [0, 16], sizes = [4, 16], strides = [1, 1]} : vector<4x64xf32> to vector<4x16xf32>
    %249 = vector.extract_strided_slice %246 {offsets = [0, 48], sizes = [4, 16], strides = [1, 1]} : vector<4x64xf32> to vector<4x16xf32>
    %250 = vector.extract_strided_slice %239 {offsets = [0, 32], sizes = [4, 16], strides = [1, 1]} : vector<4x64xf32> to vector<4x16xf32>
    %251 = math.tanh %250 : vector<4x16xf32>
    %252 = arith.mulf %248, %213 : vector<4x16xf32>
    %253 = arith.mulf %247, %251 : vector<4x16xf32>
    %254 = arith.addf %252, %253 : vector<4x16xf32>
    %255 = math.tanh %254 : vector<4x16xf32>
    %256 = arith.mulf %249, %255 : vector<4x16xf32>
    %257 = arith.addf %216, %256 : vector<4x16xf32>
    %258 = vector.extract_strided_slice %5 {offsets = [24, 0], sizes = [4, 64], strides = [1, 1]} : vector<32x64xf32> to vector<4x64xf32>
    %cst_60 = arith.constant dense<0.000000e+00> : vector<4x64xf32>
    %259 = tpu.matmul %236, %6, %cst_60 {dimension_numbers = #tpu.dot_dimension_numbers<[1], [0], [0], [1], [0, 0, 1, 1], [], []>} : vector<4x16xf32>, vector<16x64xf32>, vector<4x64xf32> -> vector<4x64xf32>
    %260 = arith.addf %258, %259 : vector<4x64xf32>
    %cst_61 = arith.constant 5.000000e-01 : f32
    %261 = vector.broadcast %cst_61 : f32 to vector<4x64xf32>
    %262 = arith.mulf %261, %260 : vector<4x64xf32>
    %263 = math.tanh %262 : vector<4x64xf32>
    %cst_62 = arith.constant 5.000000e-01 : f32
    %264 = vector.broadcast %cst_62 : f32 to vector<4x64xf32>
    %265 = arith.mulf %264, %263 : vector<4x64xf32>
    %cst_63 = arith.constant 5.000000e-01 : f32
    %266 = vector.broadcast %cst_63 : f32 to vector<4x64xf32>
    %267 = arith.addf %265, %266 : vector<4x64xf32>
    %268 = vector.extract_strided_slice %267 {offsets = [0, 0], sizes = [4, 16], strides = [1, 1]} : vector<4x64xf32> to vector<4x16xf32>
    %269 = vector.extract_strided_slice %267 {offsets = [0, 16], sizes = [4, 16], strides = [1, 1]} : vector<4x64xf32> to vector<4x16xf32>
    %270 = vector.extract_strided_slice %267 {offsets = [0, 48], sizes = [4, 16], strides = [1, 1]} : vector<4x64xf32> to vector<4x16xf32>
    %271 = vector.extract_strided_slice %260 {offsets = [0, 32], sizes = [4, 16], strides = [1, 1]} : vector<4x64xf32> to vector<4x16xf32>
    %272 = math.tanh %271 : vector<4x16xf32>
    %273 = arith.mulf %269, %234 : vector<4x16xf32>
    %274 = arith.mulf %268, %272 : vector<4x16xf32>
    %275 = arith.addf %273, %274 : vector<4x16xf32>
    %276 = math.tanh %275 : vector<4x16xf32>
    %277 = arith.mulf %270, %276 : vector<4x16xf32>
    %278 = tpu.concatenate %277, %256 in 1 : vector<4x16xf32>, vector<4x16xf32> -> vector<4x32xf32>
    %cst_64 = arith.constant dense<0.000000e+00> : vector<4x64xf32>
    %279 = tpu.matmul %278, %7, %cst_64 {dimension_numbers = #tpu.dot_dimension_numbers<[1], [0], [0], [1], [0, 0, 1, 1], [], []>} : vector<4x32xf32>, vector<32x64xf32>, vector<4x64xf32> -> vector<4x64xf32>
    %280 = arith.addf %279, %10 : vector<4x64xf32>
    %cst_65 = arith.constant 5.000000e-01 : f32
    %281 = vector.broadcast %cst_65 : f32 to vector<4x64xf32>
    %282 = arith.mulf %281, %280 : vector<4x64xf32>
    %283 = math.tanh %282 : vector<4x64xf32>
    %cst_66 = arith.constant 5.000000e-01 : f32
    %284 = vector.broadcast %cst_66 : f32 to vector<4x64xf32>
    %285 = arith.mulf %284, %283 : vector<4x64xf32>
    %cst_67 = arith.constant 5.000000e-01 : f32
    %286 = vector.broadcast %cst_67 : f32 to vector<4x64xf32>
    %287 = arith.addf %285, %286 : vector<4x64xf32>
    %288 = vector.extract_strided_slice %287 {offsets = [0, 0], sizes = [4, 16], strides = [1, 1]} : vector<4x64xf32> to vector<4x16xf32>
    %289 = vector.extract_strided_slice %287 {offsets = [0, 16], sizes = [4, 16], strides = [1, 1]} : vector<4x64xf32> to vector<4x16xf32>
    %290 = vector.extract_strided_slice %287 {offsets = [0, 48], sizes = [4, 16], strides = [1, 1]} : vector<4x64xf32> to vector<4x16xf32>
    %291 = vector.extract_strided_slice %280 {offsets = [0, 32], sizes = [4, 16], strides = [1, 1]} : vector<4x64xf32> to vector<4x16xf32>
    %292 = math.tanh %291 : vector<4x16xf32>
    %293 = arith.mulf %289, %254 : vector<4x16xf32>
    %294 = arith.mulf %288, %292 : vector<4x16xf32>
    %295 = arith.addf %293, %294 : vector<4x16xf32>
    %296 = math.tanh %295 : vector<4x16xf32>
    %297 = arith.mulf %290, %296 : vector<4x16xf32>
    %298 = arith.addf %257, %297 : vector<4x16xf32>
    %299 = vector.extract_strided_slice %5 {offsets = [28, 0], sizes = [4, 64], strides = [1, 1]} : vector<32x64xf32> to vector<4x64xf32>
    %cst_68 = arith.constant dense<0.000000e+00> : vector<4x64xf32>
    %300 = tpu.matmul %277, %6, %cst_68 {dimension_numbers = #tpu.dot_dimension_numbers<[1], [0], [0], [1], [0, 0, 1, 1], [], []>} : vector<4x16xf32>, vector<16x64xf32>, vector<4x64xf32> -> vector<4x64xf32>
    %301 = arith.addf %299, %300 : vector<4x64xf32>
    %cst_69 = arith.constant 5.000000e-01 : f32
    %302 = vector.broadcast %cst_69 : f32 to vector<4x64xf32>
    %303 = arith.mulf %302, %301 : vector<4x64xf32>
    %304 = math.tanh %303 : vector<4x64xf32>
    %cst_70 = arith.constant 5.000000e-01 : f32
    %305 = vector.broadcast %cst_70 : f32 to vector<4x64xf32>
    %306 = arith.mulf %305, %304 : vector<4x64xf32>
    %cst_71 = arith.constant 5.000000e-01 : f32
    %307 = vector.broadcast %cst_71 : f32 to vector<4x64xf32>
    %308 = arith.addf %306, %307 : vector<4x64xf32>
    %309 = vector.extract_strided_slice %308 {offsets = [0, 0], sizes = [4, 16], strides = [1, 1]} : vector<4x64xf32> to vector<4x16xf32>
    %310 = vector.extract_strided_slice %308 {offsets = [0, 16], sizes = [4, 16], strides = [1, 1]} : vector<4x64xf32> to vector<4x16xf32>
    %311 = vector.extract_strided_slice %308 {offsets = [0, 48], sizes = [4, 16], strides = [1, 1]} : vector<4x64xf32> to vector<4x16xf32>
    %312 = vector.extract_strided_slice %301 {offsets = [0, 32], sizes = [4, 16], strides = [1, 1]} : vector<4x64xf32> to vector<4x16xf32>
    %313 = math.tanh %312 : vector<4x16xf32>
    %314 = arith.mulf %310, %275 : vector<4x16xf32>
    %315 = arith.mulf %309, %313 : vector<4x16xf32>
    %316 = arith.addf %314, %315 : vector<4x16xf32>
    %317 = math.tanh %316 : vector<4x16xf32>
    %318 = arith.mulf %311, %317 : vector<4x16xf32>
    %319 = tpu.concatenate %318, %297 in 1 : vector<4x16xf32>, vector<4x16xf32> -> vector<4x32xf32>
    %cst_72 = arith.constant dense<0.000000e+00> : vector<4x64xf32>
    %320 = tpu.matmul %319, %7, %cst_72 {dimension_numbers = #tpu.dot_dimension_numbers<[1], [0], [0], [1], [0, 0, 1, 1], [], []>} : vector<4x32xf32>, vector<32x64xf32>, vector<4x64xf32> -> vector<4x64xf32>
    %321 = arith.addf %320, %10 : vector<4x64xf32>
    %cst_73 = arith.constant 5.000000e-01 : f32
    %322 = vector.broadcast %cst_73 : f32 to vector<4x64xf32>
    %323 = arith.mulf %322, %321 : vector<4x64xf32>
    %324 = math.tanh %323 : vector<4x64xf32>
    %cst_74 = arith.constant 5.000000e-01 : f32
    %325 = vector.broadcast %cst_74 : f32 to vector<4x64xf32>
    %326 = arith.mulf %325, %324 : vector<4x64xf32>
    %cst_75 = arith.constant 5.000000e-01 : f32
    %327 = vector.broadcast %cst_75 : f32 to vector<4x64xf32>
    %328 = arith.addf %326, %327 : vector<4x64xf32>
    %329 = vector.extract_strided_slice %328 {offsets = [0, 0], sizes = [4, 16], strides = [1, 1]} : vector<4x64xf32> to vector<4x16xf32>
    %330 = vector.extract_strided_slice %328 {offsets = [0, 16], sizes = [4, 16], strides = [1, 1]} : vector<4x64xf32> to vector<4x16xf32>
    %331 = vector.extract_strided_slice %328 {offsets = [0, 48], sizes = [4, 16], strides = [1, 1]} : vector<4x64xf32> to vector<4x16xf32>
    %332 = vector.extract_strided_slice %321 {offsets = [0, 32], sizes = [4, 16], strides = [1, 1]} : vector<4x64xf32> to vector<4x16xf32>
    %333 = math.tanh %332 : vector<4x16xf32>
    %334 = arith.mulf %330, %295 : vector<4x16xf32>
    %335 = arith.mulf %329, %333 : vector<4x16xf32>
    %336 = arith.addf %334, %335 : vector<4x16xf32>
    %337 = math.tanh %336 : vector<4x16xf32>
    %338 = arith.mulf %331, %337 : vector<4x16xf32>
    %339 = arith.addf %298, %338 : vector<4x16xf32>
    %c0_76 = arith.constant 0 : index
    %c0_77 = arith.constant 0 : index
    %340 = vector.load %arg6[%c0_76, %c0_77] : memref<16x8xf32, #tpu.memory_space<vmem>>, vector<16x8xf32>
    %cst_78 = arith.constant dense<0.000000e+00> : vector<4x8xf32>
    %341 = tpu.matmul %339, %340, %cst_78 {dimension_numbers = #tpu.dot_dimension_numbers<[1], [0], [0], [1], [0, 0, 1, 1], [], []>} : vector<4x16xf32>, vector<16x8xf32>, vector<4x8xf32> -> vector<4x8xf32>
    %c0_79 = arith.constant 0 : index
    %c0_80 = arith.constant 0 : index
    %342 = vector.load %arg7[%c0_79, %c0_80] : memref<1x8xf32, #tpu.memory_space<vmem>>, vector<1x8xf32>
    %343 = vector.broadcast %342 : vector<1x8xf32> to vector<4x8xf32>
    %344 = arith.addf %341, %343 : vector<4x8xf32>
    %cst_81 = arith.constant 0.000000e+00 : f32
    %345 = vector.broadcast %cst_81 : f32 to vector<4x8xf32>
    %346 = arith.maximumf %344, %345 : vector<4x8xf32>
    %c0_82 = arith.constant 0 : index
    %c0_83 = arith.constant 0 : index
    %347 = vector.load %arg8[%c0_82, %c0_83] : memref<4x8xf32, #tpu.memory_space<vmem>>, vector<4x8xf32>
    tpu.vector_store %arg8[%c0_82, %c0_83], %346 {strides = array<i32>} : memref<4x8xf32, #tpu.memory_space<vmem>>, vector<4x8xf32>,
    return
  }
}

</mosaic_0001>

<llo_original>
// kernel: tpu_custom_call.1
$region0: #{tpu_custom_call.1}
  #allocation0 [shape = 'u32[]', space=smem, size = 0x4, offset = 0x4, fixed_abs, tag = 'smem constant byte address 0x4 - core index']
  #allocation1 [shape = 'u32[144,128]{1,0:T(1,128)}', space=vmem, size = 0x12000, scoped, tag = 'internal scratch']
  %s0 = inlined_call_operand.vmem [shape: f32[32,16], index: 0, kind: input, shape index: {}]
  %s1 = inlined_call_operand.vmem [shape: f32[16,64], index: 1, kind: input, shape index: {}]
  %s2 = inlined_call_operand.vmem [shape: f32[16,64], index: 2, kind: input, shape index: {}]
  %s3 = inlined_call_operand.vmem [shape: f32[1,64], index: 3, kind: input, shape index: {}]
  %s4 = inlined_call_operand.vmem [shape: f32[32,64], index: 4, kind: input, shape index: {}]
  %s5 = inlined_call_operand.vmem [shape: f32[1,64], index: 5, kind: input, shape index: {}]
  %s6 = inlined_call_operand.vmem [shape: f32[16,8], index: 6, kind: input, shape index: {}]
  %s7 = inlined_call_operand.vmem [shape: f32[1,8], index: 7, kind: input, shape index: {}]
  %s8 = inlined_call_operand.hbm [shape: f32[4,8], index: 8, kind: output, shape index: {}]
  %s9 = sld [smem:[#allocation0]]
  $region42: #{tpu_custom_call.1} parent=0
    _
  %s11 = ssub.s32 1, %s9
  %s12 = scalar_select 0, %s11, %s9
  $region1: #{tpu_custom_call.1} parent=0
    #allocation2 [shape = 'u8[2048]{0}', space=vmem, size = 0x800, scoped, tag = 'output window, operand 0, single buffered']
    #allocation3 [shape = 's32[1]{0}', space=sflag, size = 0x4, scoped, tag = 'scoped memory for tpu_custom_call.1']
    %13 = vsyncpa [#allocation3], 0
    // Predicated region
    $region2: #{tpu_custom_call.1} parent=1 // pred_check
      _
    $region3: #{tpu_custom_call.1} parent=1 // pred_check_branch
      %15 = sbr.rel (0) target = $region5
    $region4: #{tpu_custom_call.1} parent=1 // pred_region
      _
    $region5: #{tpu_custom_call.1} parent=1 // pred_fallthru
      _
    // Predicated region
    $region6: #{tpu_custom_call.1} parent=1 // pred_check
      _
    $region7: #{tpu_custom_call.1} parent=1 // pred_check_branch
      %17 = sbr.rel (0) target = $region9
    $region8: #{tpu_custom_call.1} parent=1 // pred_region
      _
    $region9: #{tpu_custom_call.1} parent=1 // pred_fallthru
      _
    // Predicated region
    $region10: #{tpu_custom_call.1} parent=1 // pred_check
      _
    $region11: #{tpu_custom_call.1} parent=1 // pred_check_branch
      %19 = sbr.rel (0) target = $region13
    $region12: #{tpu_custom_call.1} parent=1 // pred_region
      _
    $region13: #{tpu_custom_call.1} parent=1 // pred_fallthru
      _
    // Predicated region
    $region14: #{tpu_custom_call.1} parent=1 // pred_check
      _
    $region15: #{tpu_custom_call.1} parent=1 // pred_check_branch
      %21 = sbr.rel (0) target = $region17
    $region16: #{tpu_custom_call.1} parent=1 // pred_region
      _
    $region17: #{tpu_custom_call.1} parent=1 // pred_fallthru
      _
    // Predicated region
    $region18: #{tpu_custom_call.1} parent=1 // pred_check
      _
    $region19: #{tpu_custom_call.1} parent=1 // pred_check_branch
      %23 = sbr.rel (0) target = $region21
    $region20: #{tpu_custom_call.1} parent=1 // pred_region
      _
    $region21: #{tpu_custom_call.1} parent=1 // pred_fallthru
      _
    // Predicated region
    $region22: #{tpu_custom_call.1} parent=1 // pred_check
      _
    $region23: #{tpu_custom_call.1} parent=1 // pred_check_branch
      %25 = sbr.rel (0) target = $region25
    $region24: #{tpu_custom_call.1} parent=1 // pred_region
      _
    $region25: #{tpu_custom_call.1} parent=1 // pred_fallthru
      _
    // Predicated region
    $region26: #{tpu_custom_call.1} parent=1 // pred_check
      _
    $region27: #{tpu_custom_call.1} parent=1 // pred_check_branch
      %27 = sbr.rel (0) target = $region29
    $region28: #{tpu_custom_call.1} parent=1 // pred_region
      _
    $region29: #{tpu_custom_call.1} parent=1 // pred_fallthru
      _
    // Predicated region
    $region30: #{tpu_custom_call.1} parent=1 // pred_check
      _
    $region31: #{tpu_custom_call.1} parent=1 // pred_check_branch
      %29 = sbr.rel (0) target = $region33
    $region32: #{tpu_custom_call.1} parent=1 // pred_region
      _
    $region33: #{tpu_custom_call.1} parent=1 // pred_fallthru
      _
    %v30 = vld [vmem:[%s0] sm:$0xff]
    %v31 = vld [vmem:[%s0 + $0x8] sm:$0xff]
    %v32 = vld [vmem:[%s0 + $0x10] sm:$0xff]
    %v33 = vld [vmem:[%s0 + $0x18] sm:$0xff]
    %v34 = vld [vmem:[%s1] sm:$0xff]
    %v35 = vld [vmem:[%s1 + $0x8] sm:$0xff]
    %v36 = vld [vmem:[%s3] sm:$0x1]
    %v38 = vlaneseq
    %v39 = vshrl.u32 %v38, 7
    %v40 = vsub.s32 0, %v39
    %v41 = vrot.slane %v36, %v40
    %vm43 = vcmask 130048
    %v45 = vsel %vm43, %v30, 0
    %v48 = vsel %vm43, %v31, 0
    %v51 = vsel %vm43, %v32, 0
    %v54 = vsel %vm43, %v33, 0
    %56 = vmatprep.subr.mxu0 0.0
    %57 = vmatpush1.msra.mxu0 %v34
    %58 = vmatprep.subr.mxu0 0.0
    %59 = vmatpush1.msra.mxu0 %v35
    %60 = vmatprep.subr.mxu0 0.0
    %61 = vmatpush1.msra.mxu0 0.0
    %62 = vmatprep.subr.mxu0 0.0
    %63 = vmatpush1.msra.mxu0 0.0
    %64 = vmatprep.subr.mxu0 0.0
    %65 = vmatpush1.msra.mxu0 0.0
    %66 = vmatprep.subr.mxu0 0.0
    %67 = vmatpush1.msra.mxu0 0.0
    %68 = vmatprep.subr.mxu0 0.0
    %69 = vmatpush1.msra.mxu0 0.0
    %70 = vmatprep.subr.mxu0 0.0
    %71 = vmatpush1.msra.mxu0 0.0
    %72 = vmatprep.subr.mxu0 0.0
    %73 = vmatpush1.msra.mxu0 0.0
    %74 = vmatprep.subr.mxu0 0.0
    %75 = vmatpush1.msra.mxu0 0.0
    %76 = vmatprep.subr.mxu0 0.0
    %77 = vmatpush1.msra.mxu0 0.0
    %78 = vmatprep.subr.mxu0 0.0
    %79 = vmatpush1.msra.mxu0 0.0
    %80 = vmatprep.subr.mxu0 0.0
    %81 = vmatpush1.msra.mxu0 0.0
    %82 = vmatprep.subr.mxu0 0.0
    %83 = vmatpush1.msra.mxu0 0.0
    %84 = vmatprep.subr.mxu0 0.0
    %85 = vmatpush1.msra.mxu0 0.0
    %86 = vmatprep.subr.mxu0 0.0
    %87 = vmatpush1.msra.mxu0 0.0
    %88 = vmatprep.subr.mxu0 0.0
    %89 = vmatpush1.msra.mxu0 0.0
    %90 = vmatprep.subr.mxu0 0.0
    %91 = vmatpush1.msra.mxu0 0.0
    %92 = vmatprep.subr.mxu0 0.0
    %93 = vmatpush1.msra.mxu0 0.0
    %94 = vmatprep.subr.mxu0 0.0
    %95 = vmatpush1.msra.mxu0 0.0
    %96 = vmatprep.subr.mxu0 0.0
    %97 = vmatpush1.msra.mxu0 0.0
    %98 = vmatprep.subr.mxu0 0.0
    %99 = vmatpush1.msra.mxu0 0.0
    %100 = vmatprep.subr.mxu0 0.0
    %101 = vmatpush1.msra.mxu0 0.0
    %102 = vmatprep.subr.mxu0 0.0
    %103 = vmatpush1.msra.mxu0 0.0
    %104 = vmatprep.subr.mxu0 0.0
    %105 = vmatpush1.msra.mxu0 0.0
    %106 = vmatprep.subr.mxu0 0.0
    %107 = vmatpush1.msra.mxu0 0.0
    %108 = vmatprep.subr.mxu0 0.0
    %109 = vmatpush1.msra.mxu0 0.0
    %110 = vmatprep.subr.mxu0 0.0
    %111 = vmatpush1.msra.mxu0 0.0
    %112 = vmatprep.subr.mxu0 0.0
    %113 = vmatpush1.msra.mxu0 0.0
    %114 = vmatprep.subr.mxu0 0.0
    %115 = vmatpush1.msra.mxu0 0.0
    %116 = vmatprep.subr.mxu0 0.0
    %117 = vmatpush1.msra.mxu0 0.0
    %118 = vmatprep.subr.mxu0 0.0
    %119 = vmatpush1.msra.mxu0 0.0
    %120 = vmatprep.mubr.f32.mxu0 0.0
    %121 = vmatmul.mubr.f32.gmra.mrb[0].mxu0 %v45
    %v122 = vpop.f32.mrb[0].mxu0
    %v123 = vadd.f32 %v41, %v122
    %v124 = vpop.f32.mrb[0].mxu0
    %125 = vmatprep.mubr.f32.mxu0 0.0
    %126 = vmatmul.mubr.f32.gmra.mrb[0].mxu0 %v48
    %v127 = vpop.f32.mrb[0].mxu0
    %v128 = vadd.f32 %v41, %v127
    %v129 = vpop.f32.mrb[0].mxu0
    %130 = vmatprep.mubr.f32.mxu0 0.0
    %131 = vmatmul.mubr.f32.gmra.mrb[0].mxu0 %v51
    %v132 = vpop.f32.mrb[0].mxu0
    %v133 = vadd.f32 %v41, %v132
    %v134 = vpop.f32.mrb[0].mxu0
    %135 = vmatprep.mubr.f32.mxu0 0.0
    %136 = vmatmul.mubr.f32.gmra.mrb[0].mxu0 %v54
    %v137 = vpop.f32.mrb[0].mxu0
    %v138 = vadd.f32 %v41, %v137
    %v139 = vpop.f32.mrb[0].mxu0
    %140 = vdwg.mxu0
    %v141 = vld [vmem:[%s2] sm:$0xff]
    %v142 = vld [vmem:[%s2 + $0x8] sm:$0xff]
    %v143 = vld [vmem:[%s4] sm:$0xff]
    %v144 = vld [vmem:[%s4 + $0x8] sm:$0xff]
    %v145 = vld [vmem:[%s4 + $0x10] sm:$0xff]
    %v146 = vld [vmem:[%s4 + $0x18] sm:$0xff]
    %v147 = vld [vmem:[%s5] sm:$0x1]
    %v149 = vlaneseq
    %v150 = vshrl.u32 %v149, 7
    %v151 = vsub.s32 0, %v150
    %v152 = vrot.slane %v147, %v151
    %v155 = vsel %vm43, 0.0, 0
    %157 = vmatprep.subr.mxu0 0.0
    %158 = vmatpush1.msra.mxu0 %v141
    %159 = vmatprep.subr.mxu0 0.0
    %160 = vmatpush1.msra.mxu0 %v142
    %161 = vmatprep.subr.mxu0 0.0
    %162 = vmatpush1.msra.mxu0 0.0
    %163 = vmatprep.subr.mxu0 0.0
    %164 = vmatpush1.msra.mxu0 0.0
    %165 = vmatprep.subr.mxu0 0.0
    %166 = vmatpush1.msra.mxu0 0.0
    %167 = vmatprep.subr.mxu0 0.0
    %168 = vmatpush1.msra.mxu0 0.0
    %169 = vmatprep.subr.mxu0 0.0
    %170 = vmatpush1.msra.mxu0 0.0
    %171 = vmatprep.subr.mxu0 0.0
    %172 = vmatpush1.msra.mxu0 0.0
    %173 = vmatprep.subr.mxu0 0.0
    %174 = vmatpush1.msra.mxu0 0.0
    %175 = vmatprep.subr.mxu0 0.0
    %176 = vmatpush1.msra.mxu0 0.0
    %177 = vmatprep.subr.mxu0 0.0
    %178 = vmatpush1.msra.mxu0 0.0
    %179 = vmatprep.subr.mxu0 0.0
    %180 = vmatpush1.msra.mxu0 0.0
    %181 = vmatprep.subr.mxu0 0.0
    %182 = vmatpush1.msra.mxu0 0.0
    %183 = vmatprep.subr.mxu0 0.0
    %184 = vmatpush1.msra.mxu0 0.0
    %185 = vmatprep.subr.mxu0 0.0
    %186 = vmatpush1.msra.mxu0 0.0
    %187 = vmatprep.subr.mxu0 0.0
    %188 = vmatpush1.msra.mxu0 0.0
    %189 = vmatprep.subr.mxu0 0.0
    %190 = vmatpush1.msra.mxu0 0.0
    %191 = vmatprep.subr.mxu0 0.0
    %192 = vmatpush1.msra.mxu0 0.0
    %193 = vmatprep.subr.mxu0 0.0
    %194 = vmatpush1.msra.mxu0 0.0
    %195 = vmatprep.subr.mxu0 0.0
    %196 = vmatpush1.msra.mxu0 0.0
    %197 = vmatprep.subr.mxu0 0.0
    %198 = vmatpush1.msra.mxu0 0.0
    %199 = vmatprep.subr.mxu0 0.0
    %200 = vmatpush1.msra.mxu0 0.0
    %201 = vmatprep.subr.mxu0 0.0
    %202 = vmatpush1.msra.mxu0 0.0
    %203 = vmatprep.subr.mxu0 0.0
    %204 = vmatpush1.msra.mxu0 0.0
    %205 = vmatprep.subr.mxu0 0.0
    %206 = vmatpush1.msra.mxu0 0.0
    %207 = vmatprep.subr.mxu0 0.0
    %208 = vmatpush1.msra.mxu0 0.0
    %209 = vmatprep.subr.mxu0 0.0
    %210 = vmatpush1.msra.mxu0 0.0
    %211 = vmatprep.subr.mxu0 0.0
    %212 = vmatpush1.msra.mxu0 0.0
    %213 = vmatprep.subr.mxu0 0.0
    %214 = vmatpush1.msra.mxu0 0.0
    %215 = vmatprep.subr.mxu0 0.0
    %216 = vmatpush1.msra.mxu0 0.0
    %217 = vmatprep.subr.mxu0 0.0
    %218 = vmatpush1.msra.mxu0 0.0
    %219 = vmatprep.subr.mxu0 0.0
    %220 = vmatpush1.msra.mxu0 0.0
    %221 = vmatprep.mubr.f32.mxu0 0.0
    %222 = vmatmul.mubr.f32.gmra.mrb[0].mxu0 %v155
    %v223 = vpop.f32.mrb[0].mxu0
    %v224 = vadd.f32 0.0, %v223
    %v225 = vpop.f32.mrb[0].mxu0
    %226 = vdwg.mxu0
    %v227 = vadd.f32 %v123, %v224
    %v228 = vmul.f32 %v227, 0.5
    %v229 = vtanh.pop %v228
    %v230 = vmul.f32 %v229, 0.5
    %v231 = vadd.f32 %v230, 0.5
    %v232 = vtanh.pop %v227
    %v233 = vmul.f32 %v231, 0.0
    %235 = vrot.lane.b32.xlu0 %v232, 96
    %v236 = vpop.permute.xlu0 %235
    %v238 = vmul.f32 %v231, %v236
    %240 = vrot.lane.b32.xlu0 %v238, 16
    %v241 = vpop.permute.xlu0 %240
    %v243 = vadd.f32 %v233, %v241
    %v244 = vtanh.pop %v243
    %246 = vrot.lane.b32.xlu0 %v244, 32
    %v247 = vpop.permute.xlu0 %246
    %v249 = vmul.f32 %v231, %v247
    %251 = vrot.lane.b32.xlu0 %v249, 80
    %v252 = vpop.permute.xlu0 %251
    %v254 = vsel %vm43, %v252, 0.0
    %vm255 = vcmask 261120
    %v257 = vsel %vm255, %v254, 0
    %259 = vmatprep.subr.mxu0 0.0
    %260 = vmatpush1.msra.mxu0 %v143
    %261 = vmatprep.subr.mxu0 0.0
    %262 = vmatpush1.msra.mxu0 %v144
    %263 = vmatprep.subr.mxu0 0.0
    %264 = vmatpush1.msra.mxu0 %v145
    %265 = vmatprep.subr.mxu0 0.0
    %266 = vmatpush1.msra.mxu0 %v146
    %267 = vmatprep.subr.mxu0 0.0
    %268 = vmatpush1.msra.mxu0 0.0
    %269 = vmatprep.subr.mxu0 0.0
    %270 = vmatpush1.msra.mxu0 0.0
    %271 = vmatprep.subr.mxu0 0.0
    %272 = vmatpush1.msra.mxu0 0.0
    %273 = vmatprep.subr.mxu0 0.0
    %274 = vmatpush1.msra.mxu0 0.0
    %275 = vmatprep.subr.mxu0 0.0
    %276 = vmatpush1.msra.mxu0 0.0
    %277 = vmatprep.subr.mxu0 0.0
    %278 = vmatpush1.msra.mxu0 0.0
    %279 = vmatprep.subr.mxu0 0.0
    %280 = vmatpush1.msra.mxu0 0.0
    %281 = vmatprep.subr.mxu0 0.0
    %282 = vmatpush1.msra.mxu0 0.0
    %283 = vmatprep.subr.mxu0 0.0
    %284 = vmatpush1.msra.mxu0 0.0
    %285 = vmatprep.subr.mxu0 0.0
    %286 = vmatpush1.msra.mxu0 0.0
    %287 = vmatprep.subr.mxu0 0.0
    %288 = vmatpush1.msra.mxu0 0.0
    %289 = vmatprep.subr.mxu0 0.0
    %290 = vmatpush1.msra.mxu0 0.0
    %291 = vmatprep.subr.mxu0 0.0
    %292 = vmatpush1.msra.mxu0 0.0
    %293 = vmatprep.subr.mxu0 0.0
    %294 = vmatpush1.msra.mxu0 0.0
    %295 = vmatprep.subr.mxu0 0.0
    %296 = vmatpush1.msra.mxu0 0.0
    %297 = vmatprep.subr.mxu0 0.0
    %298 = vmatpush1.msra.mxu0 0.0
    %299 = vmatprep.subr.mxu0 0.0
    %300 = vmatpush1.msra.mxu0 0.0
    %301 = vmatprep.subr.mxu0 0.0
    %302 = vmatpush1.msra.mxu0 0.0
    %303 = vmatprep.subr.mxu0 0.0
    %304 = vmatpush1.msra.mxu0 0.0
    %305 = vmatprep.subr.mxu0 0.0
    %306 = vmatpush1.msra.mxu0 0.0
    %307 = vmatprep.subr.mxu0 0.0
    %308 = vmatpush1.msra.mxu0 0.0
    %309 = vmatprep.subr.mxu0 0.0
    %310 = vmatpush1.msra.mxu0 0.0
    %311 = vmatprep.subr.mxu0 0.0
    %312 = vmatpush1.msra.mxu0 0.0
    %313 = vmatprep.subr.mxu0 0.0
    %314 = vmatpush1.msra.mxu0 0.0
    %315 = vmatprep.subr.mxu0 0.0
    %316 = vmatpush1.msra.mxu0 0.0
    %317 = vmatprep.subr.mxu0 0.0
    %318 = vmatpush1.msra.mxu0 0.0
    %319 = vmatprep.subr.mxu0 0.0
    %320 = vmatpush1.msra.mxu0 0.0
    %321 = vmatprep.subr.mxu0 0.0
    %322 = vmatpush1.msra.mxu0 0.0
    %323 = vmatprep.mubr.f32.mxu0 0.0
    %324 = vmatmul.mubr.f32.gmra.mrb[0].mxu0 %v257
    %v325 = vpop.f32.mrb[0].mxu0
    %v326 = vadd.f32 %v152, %v325
    %v327 = vpop.f32.mrb[0].mxu0
    %328 = vdwg.mxu0
    %v329 = vmul.f32 %v326, 0.5
    %v330 = vtanh.pop %v329
    %v331 = vmul.f32 %v330, 0.5
    %v332 = vadd.f32 %v331, 0.5
    %v333 = vtanh.pop %v326
    %v334 = vmul.f32 %v332, 0.0
    %336 = vrot.lane.b32.xlu0 %v333, 96
    %v337 = vpop.permute.xlu0 %336
    %v339 = vmul.f32 %v332, %v337
    %341 = vrot.lane.b32.xlu0 %v339, 16
    %v342 = vpop.permute.xlu0 %341
    %v344 = vadd.f32 %v334, %v342
    %v345 = vtanh.pop %v344
    %347 = vrot.lane.b32.xlu0 %v345, 32
    %v348 = vpop.permute.xlu0 %347
    %v350 = vmul.f32 %v332, %v348
    %v351 = vadd.f32 %v350, 0.0
    %v352 = vsel %vm43, %v252, 0
    %354 = vmatprep.subr.mxu0 0.0
    %355 = vmatpush1.msra.mxu0 %v141
    %356 = vmatprep.subr.mxu0 0.0
    %357 = vmatpush1.msra.mxu0 %v142
    %358 = vmatprep.subr.mxu0 0.0
    %359 = vmatpush1.msra.mxu0 0.0
    %360 = vmatprep.subr.mxu0 0.0
    %361 = vmatpush1.msra.mxu0 0.0
    %362 = vmatprep.subr.mxu0 0.0
    %363 = vmatpush1.msra.mxu0 0.0
    %364 = vmatprep.subr.mxu0 0.0
    %365 = vmatpush1.msra.mxu0 0.0
    %366 = vmatprep.subr.mxu0 0.0
    %367 = vmatpush1.msra.mxu0 0.0
    %368 = vmatprep.subr.mxu0 0.0
    %369 = vmatpush1.msra.mxu0 0.0
    %370 = vmatprep.subr.mxu0 0.0
    %371 = vmatpush1.msra.mxu0 0.0
    %372 = vmatprep.subr.mxu0 0.0
    %373 = vmatpush1.msra.mxu0 0.0
    %374 = vmatprep.subr.mxu0 0.0
    %375 = vmatpush1.msra.mxu0 0.0
    %376 = vmatprep.subr.mxu0 0.0
    %377 = vmatpush1.msra.mxu0 0.0
    %378 = vmatprep.subr.mxu0 0.0
    %379 = vmatpush1.msra.mxu0 0.0
    %380 = vmatprep.subr.mxu0 0.0
    %381 = vmatpush1.msra.mxu0 0.0
    %382 = vmatprep.subr.mxu0 0.0
    %383 = vmatpush1.msra.mxu0 0.0
    %384 = vmatprep.subr.mxu0 0.0
    %385 = vmatpush1.msra.mxu0 0.0
    %386 = vmatprep.subr.mxu0 0.0
    %387 = vmatpush1.msra.mxu0 0.0
    %388 = vmatprep.subr.mxu0 0.0
    %389 = vmatpush1.msra.mxu0 0.0
    %390 = vmatprep.subr.mxu0 0.0
    %391 = vmatpush1.msra.mxu0 0.0
    %392 = vmatprep.subr.mxu0 0.0
    %393 = vmatpush1.msra.mxu0 0.0
    %394 = vmatprep.subr.mxu0 0.0
    %395 = vmatpush1.msra.mxu0 0.0
    %396 = vmatprep.subr.mxu0 0.0
    %397 = vmatpush1.msra.mxu0 0.0
    %398 = vmatprep.subr.mxu0 0.0
    %399 = vmatpush1.msra.mxu0 0.0
    %400 = vmatprep.subr.mxu0 0.0
    %401 = vmatpush1.msra.mxu0 0.0
    %402 = vmatprep.subr.mxu0 0.0
    %403 = vmatpush1.msra.mxu0 0.0
    %404 = vmatprep.subr.mxu0 0.0
    %405 = vmatpush1.msra.mxu0 0.0
    %406 = vmatprep.subr.mxu0 0.0
    %407 = vmatpush1.msra.mxu0 0.0
    %408 = vmatprep.subr.mxu0 0.0
    %409 = vmatpush1.msra.mxu0 0.0
    %410 = vmatprep.subr.mxu0 0.0
    %411 = vmatpush1.msra.mxu0 0.0
    %412 = vmatprep.subr.mxu0 0.0
    %413 = vmatpush1.msra.mxu0 0.0
    %414 = vmatprep.subr.mxu0 0.0
    %415 = vmatpush1.msra.mxu0 0.0
    %416 = vmatprep.subr.mxu0 0.0
    %417 = vmatpush1.msra.mxu0 0.0
    %418 = vmatprep.mubr.f32.mxu0 0.0
    %419 = vmatmul.mubr.f32.gmra.mrb[0].mxu0 %v352
    %v420 = vpop.f32.mrb[0].mxu0
    %v421 = vadd.f32 0.0, %v420
    %v422 = vpop.f32.mrb[0].mxu0
    %423 = vdwg.mxu0
    %v425 = vrot.slane %v421, 4
    %v427 = vadd.f32 %v123, %v425
    %v428 = vmul.f32 %v427, 0.5
    %v429 = vtanh.pop %v428
    %v430 = vmul.f32 %v429, 0.5
    %v431 = vadd.f32 %v430, 0.5
    %v432 = vtanh.pop %v427
    %v434 = vrot.slane %v243, 4
    %v436 = vmul.f32 %v431, %v434
    %438 = vrot.lane.b32.xlu0 %v432, 96
    %v439 = vpop.permute.xlu0 %438
    %v441 = vmul.f32 %v431, %v439
    %443 = vrot.lane.b32.xlu0 %v441, 16
    %v444 = vpop.permute.xlu0 %443
    %v446 = vadd.f32 %v436, %v444
    %v447 = vtanh.pop %v446
    %449 = vrot.lane.b32.xlu0 %v447, 32
    %v450 = vpop.permute.xlu0 %449
    %v452 = vmul.f32 %v431, %v450
    %454 = vrot.lane.b32.xlu0 %v452, 80
    %v455 = vpop.permute.xlu0 %454
    %v458 = vrot.slane %v350, 4
    %459 = vrot.lane.b32.xlu0 %v458, 96
    %v460 = vpop.permute.xlu0 %459
    %v462 = vsel %vm43, %v455, %v460
    %v464 = vrot.slane %v462, 4
    %v465 = vsel %vm255, %v464, 0
    %467 = vmatprep.subr.mxu0 0.0
    %468 = vmatpush1.msra.mxu0 %v143
    %469 = vmatprep.subr.mxu0 0.0
    %470 = vmatpush1.msra.mxu0 %v144
    %471 = vmatprep.subr.mxu0 0.0
    %472 = vmatpush1.msra.mxu0 %v145
    %473 = vmatprep.subr.mxu0 0.0
    %474 = vmatpush1.msra.mxu0 %v146
    %475 = vmatprep.subr.mxu0 0.0
    %476 = vmatpush1.msra.mxu0 0.0
    %477 = vmatprep.subr.mxu0 0.0
    %478 = vmatpush1.msra.mxu0 0.0
    %479 = vmatprep.subr.mxu0 0.0
    %480 = vmatpush1.msra.mxu0 0.0
    %481 = vmatprep.subr.mxu0 0.0
    %482 = vmatpush1.msra.mxu0 0.0
    %483 = vmatprep.subr.mxu0 0.0
    %484 = vmatpush1.msra.mxu0 0.0
    %485 = vmatprep.subr.mxu0 0.0
    %486 = vmatpush1.msra.mxu0 0.0
    %487 = vmatprep.subr.mxu0 0.0
    %488 = vmatpush1.msra.mxu0 0.0
    %489 = vmatprep.subr.mxu0 0.0
    %490 = vmatpush1.msra.mxu0 0.0
    %491 = vmatprep.subr.mxu0 0.0
    %492 = vmatpush1.msra.mxu0 0.0
    %493 = vmatprep.subr.mxu0 0.0
    %494 = vmatpush1.msra.mxu0 0.0
    %495 = vmatprep.subr.mxu0 0.0
    %496 = vmatpush1.msra.mxu0 0.0
    %497 = vmatprep.subr.mxu0 0.0
    %498 = vmatpush1.msra.mxu0 0.0
    %499 = vmatprep.subr.mxu0 0.0
    %500 = vmatpush1.msra.mxu0 0.0
    %501 = vmatprep.subr.mxu0 0.0
    %502 = vmatpush1.msra.mxu0 0.0
    %503 = vmatprep.subr.mxu0 0.0
    %504 = vmatpush1.msra.mxu0 0.0
    %505 = vmatprep.subr.mxu0 0.0
    %506 = vmatpush1.msra.mxu0 0.0
    %507 = vmatprep.subr.mxu0 0.0
    %508 = vmatpush1.msra.mxu0 0.0
    %509 = vmatprep.subr.mxu0 0.0
    %510 = vmatpush1.msra.mxu0 0.0
    %511 = vmatprep.subr.mxu0 0.0
    %512 = vmatpush1.msra.mxu0 0.0
    %513 = vmatprep.subr.mxu0 0.0
    %514 = vmatpush1.msra.mxu0 0.0
    %515 = vmatprep.subr.mxu0 0.0
    %516 = vmatpush1.msra.mxu0 0.0
    %517 = vmatprep.subr.mxu0 0.0
    %518 = vmatpush1.msra.mxu0 0.0
    %519 = vmatprep.subr.mxu0 0.0
    %520 = vmatpush1.msra.mxu0 0.0
    %521 = vmatprep.subr.mxu0 0.0
    %522 = vmatpush1.msra.mxu0 0.0
    %523 = vmatprep.subr.mxu0 0.0
    %524 = vmatpush1.msra.mxu0 0.0
    %525 = vmatprep.subr.mxu0 0.0
    %526 = vmatpush1.msra.mxu0 0.0
    %527 = vmatprep.subr.mxu0 0.0
    %528 = vmatpush1.msra.mxu0 0.0
    %529 = vmatprep.subr.mxu0 0.0
    %530 = vmatpush1.msra.mxu0 0.0
    %531 = vmatprep.mubr.f32.mxu0 0.0
    %532 = vmatmul.mubr.f32.gmra.mrb[0].mxu0 %v465
    %v533 = vpop.f32.mrb[0].mxu0
    %v534 = vadd.f32 %v152, %v533
    %v535 = vpop.f32.mrb[0].mxu0
    %536 = vdwg.mxu0
    %v537 = vmul.f32 %v534, 0.5
    %v538 = vtanh.pop %v537
    %v539 = vmul.f32 %v538, 0.5
    %v540 = vadd.f32 %v539, 0.5
    %v541 = vtanh.pop %v534
    %v542 = vmul.f32 %v540, %v344
    %544 = vrot.lane.b32.xlu0 %v541, 96
    %v545 = vpop.permute.xlu0 %544
    %v547 = vmul.f32 %v540, %v545
    %549 = vrot.lane.b32.xlu0 %v547, 16
    %v550 = vpop.permute.xlu0 %549
    %v552 = vadd.f32 %v542, %v550
    %v553 = vtanh.pop %v552
    %555 = vrot.lane.b32.xlu0 %v553, 32
    %v556 = vpop.permute.xlu0 %555
    %v558 = vmul.f32 %v540, %v556
    %v559 = vadd.f32 %v351, %v558
    %v560 = vrot.slane %v452, 4
    %561 = vrot.lane.b32.xlu0 %v560, 80
    %v562 = vpop.permute.xlu0 %561
    %v563 = vsel %vm43, %v562, 0
    %565 = vmatprep.subr.mxu0 0.0
    %566 = vmatpush1.msra.mxu0 %v141
    %567 = vmatprep.subr.mxu0 0.0
    %568 = vmatpush1.msra.mxu0 %v142
    %569 = vmatprep.subr.mxu0 0.0
    %570 = vmatpush1.msra.mxu0 0.0
    %571 = vmatprep.subr.mxu0 0.0
    %572 = vmatpush1.msra.mxu0 0.0
    %573 = vmatprep.subr.mxu0 0.0
    %574 = vmatpush1.msra.mxu0 0.0
    %575 = vmatprep.subr.mxu0 0.0
    %576 = vmatpush1.msra.mxu0 0.0
    %577 = vmatprep.subr.mxu0 0.0
    %578 = vmatpush1.msra.mxu0 0.0
    %579 = vmatprep.subr.mxu0 0.0
    %580 = vmatpush1.msra.mxu0 0.0
    %581 = vmatprep.subr.mxu0 0.0
    %582 = vmatpush1.msra.mxu0 0.0
    %583 = vmatprep.subr.mxu0 0.0
    %584 = vmatpush1.msra.mxu0 0.0
    %585 = vmatprep.subr.mxu0 0.0
    %586 = vmatpush1.msra.mxu0 0.0
    %587 = vmatprep.subr.mxu0 0.0
    %588 = vmatpush1.msra.mxu0 0.0
    %589 = vmatprep.subr.mxu0 0.0
    %590 = vmatpush1.msra.mxu0 0.0
    %591 = vmatprep.subr.mxu0 0.0
    %592 = vmatpush1.msra.mxu0 0.0
    %593 = vmatprep.subr.mxu0 0.0
    %594 = vmatpush1.msra.mxu0 0.0
    %595 = vmatprep.subr.mxu0 0.0
    %596 = vmatpush1.msra.mxu0 0.0
    %597 = vmatprep.subr.mxu0 0.0
    %598 = vmatpush1.msra.mxu0 0.0
    %599 = vmatprep.subr.mxu0 0.0
    %600 = vmatpush1.msra.mxu0 0.0
    %601 = vmatprep.subr.mxu0 0.0
    %602 = vmatpush1.msra.mxu0 0.0
    %603 = vmatprep.subr.mxu0 0.0
    %604 = vmatpush1.msra.mxu0 0.0
    %605 = vmatprep.subr.mxu0 0.0
    %606 = vmatpush1.msra.mxu0 0.0
    %607 = vmatprep.subr.mxu0 0.0
    %608 = vmatpush1.msra.mxu0 0.0
    %609 = vmatprep.subr.mxu0 0.0
    %610 = vmatpush1.msra.mxu0 0.0
    %611 = vmatprep.subr.mxu0 0.0
    %612 = vmatpush1.msra.mxu0 0.0
    %613 = vmatprep.subr.mxu0 0.0
    %614 = vmatpush1.msra.mxu0 0.0
    %615 = vmatprep.subr.mxu0 0.0
    %616 = vmatpush1.msra.mxu0 0.0
    %617 = vmatprep.subr.mxu0 0.0
    %618 = vmatpush1.msra.mxu0 0.0
    %619 = vmatprep.subr.mxu0 0.0
    %620 = vmatpush1.msra.mxu0 0.0
    %621 = vmatprep.subr.mxu0 0.0
    %622 = vmatpush1.msra.mxu0 0.0
    %623 = vmatprep.subr.mxu0 0.0
    %624 = vmatpush1.msra.mxu0 0.0
    %625 = vmatprep.subr.mxu0 0.0
    %626 = vmatpush1.msra.mxu0 0.0
    %627 = vmatprep.subr.mxu0 0.0
    %628 = vmatpush1.msra.mxu0 0.0
    %629 = vmatprep.mubr.f32.mxu0 0.0
    %630 = vmatmul.mubr.f32.gmra.mrb[0].mxu0 %v563
    %v631 = vpop.f32.mrb[0].mxu0
    %v632 = vadd.f32 0.0, %v631
    %v633 = vpop.f32.mrb[0].mxu0
    %634 = vdwg.mxu0
    %v635 = vadd.f32 %v128, %v632
    %v636 = vmul.f32 %v635, 0.5
    %v637 = vtanh.pop %v636
    %v638 = vmul.f32 %v637, 0.5
    %v639 = vadd.f32 %v638, 0.5
    %v640 = vtanh.pop %v635
    %v642 = vrot.slane %v446, 4
    %v644 = vmul.f32 %v639, %v642
    %646 = vrot.lane.b32.xlu0 %v640, 96
    %v647 = vpop.permute.xlu0 %646
    %v649 = vmul.f32 %v639, %v647
    %651 = vrot.lane.b32.xlu0 %v649, 16
    %v652 = vpop.permute.xlu0 %651
    %v654 = vadd.f32 %v644, %v652
    %v655 = vtanh.pop %v654
    %657 = vrot.lane.b32.xlu0 %v655, 32
    %v658 = vpop.permute.xlu0 %657
    %v660 = vmul.f32 %v639, %v658
    %662 = vrot.lane.b32.xlu0 %v660, 80
    %v663 = vpop.permute.xlu0 %662
    %666 = vrot.lane.b32.xlu0 %v558, 96
    %v667 = vpop.permute.xlu0 %666
    %v669 = vsel %vm43, %v663, %v667
    %v671 = vsel %vm255, %v669, 0
    %673 = vmatprep.subr.mxu0 0.0
    %674 = vmatpush1.msra.mxu0 %v143
    %675 = vmatprep.subr.mxu0 0.0
    %676 = vmatpush1.msra.mxu0 %v144
    %677 = vmatprep.subr.mxu0 0.0
    %678 = vmatpush1.msra.mxu0 %v145
    %679 = vmatprep.subr.mxu0 0.0
    %680 = vmatpush1.msra.mxu0 %v146
    %681 = vmatprep.subr.mxu0 0.0
    %682 = vmatpush1.msra.mxu0 0.0
    %683 = vmatprep.subr.mxu0 0.0
    %684 = vmatpush1.msra.mxu0 0.0
    %685 = vmatprep.subr.mxu0 0.0
    %686 = vmatpush1.msra.mxu0 0.0
    %687 = vmatprep.subr.mxu0 0.0
    %688 = vmatpush1.msra.mxu0 0.0
    %689 = vmatprep.subr.mxu0 0.0
    %690 = vmatpush1.msra.mxu0 0.0
    %691 = vmatprep.subr.mxu0 0.0
    %692 = vmatpush1.msra.mxu0 0.0
    %693 = vmatprep.subr.mxu0 0.0
    %694 = vmatpush1.msra.mxu0 0.0
    %695 = vmatprep.subr.mxu0 0.0
    %696 = vmatpush1.msra.mxu0 0.0
    %697 = vmatprep.subr.mxu0 0.0
    %698 = vmatpush1.msra.mxu0 0.0
    %699 = vmatprep.subr.mxu0 0.0
    %700 = vmatpush1.msra.mxu0 0.0
    %701 = vmatprep.subr.mxu0 0.0
    %702 = vmatpush1.msra.mxu0 0.0
    %703 = vmatprep.subr.mxu0 0.0
    %704 = vmatpush1.msra.mxu0 0.0
    %705 = vmatprep.subr.mxu0 0.0
    %706 = vmatpush1.msra.mxu0 0.0
    %707 = vmatprep.subr.mxu0 0.0
    %708 = vmatpush1.msra.mxu0 0.0
    %709 = vmatprep.subr.mxu0 0.0
    %710 = vmatpush1.msra.mxu0 0.0
    %711 = vmatprep.subr.mxu0 0.0
    %712 = vmatpush1.msra.mxu0 0.0
    %713 = vmatprep.subr.mxu0 0.0
    %714 = vmatpush1.msra.mxu0 0.0
    %715 = vmatprep.subr.mxu0 0.0
    %716 = vmatpush1.msra.mxu0 0.0
    %717 = vmatprep.subr.mxu0 0.0
    %718 = vmatpush1.msra.mxu0 0.0
    %719 = vmatprep.subr.mxu0 0.0
    %720 = vmatpush1.msra.mxu0 0.0
    %721 = vmatprep.subr.mxu0 0.0
    %722 = vmatpush1.msra.mxu0 0.0
    %723 = vmatprep.subr.mxu0 0.0
    %724 = vmatpush1.msra.mxu0 0.0
    %725 = vmatprep.subr.mxu0 0.0
    %726 = vmatpush1.msra.mxu0 0.0
    %727 = vmatprep.subr.mxu0 0.0
    %728 = vmatpush1.msra.mxu0 0.0
    %729 = vmatprep.subr.mxu0 0.0
    %730 = vmatpush1.msra.mxu0 0.0
    %731 = vmatprep.subr.mxu0 0.0
    %732 = vmatpush1.msra.mxu0 0.0
    %733 = vmatprep.subr.mxu0 0.0
    %734 = vmatpush1.msra.mxu0 0.0
    %735 = vmatprep.subr.mxu0 0.0
    %736 = vmatpush1.msra.mxu0 0.0
    %737 = vmatprep.mubr.f32.mxu0 0.0
    %738 = vmatmul.mubr.f32.gmra.mrb[0].mxu0 %v671
    %v739 = vpop.f32.mrb[0].mxu0
    %v740 = vadd.f32 %v152, %v739
    %v741 = vpop.f32.mrb[0].mxu0
    %742 = vdwg.mxu0
    %v743 = vmul.f32 %v740, 0.5
    %v744 = vtanh.pop %v743
    %v745 = vmul.f32 %v744, 0.5
    %v746 = vadd.f32 %v745, 0.5
    %v747 = vtanh.pop %v740
    %v748 = vmul.f32 %v746, %v552
    %750 = vrot.lane.b32.xlu0 %v747, 96
    %v751 = vpop.permute.xlu0 %750
    %v753 = vmul.f32 %v746, %v751
    %755 = vrot.lane.b32.xlu0 %v753, 16
    %v756 = vpop.permute.xlu0 %755
    %v758 = vadd.f32 %v748, %v756
    %v759 = vtanh.pop %v758
    %761 = vrot.lane.b32.xlu0 %v759, 32
    %v762 = vpop.permute.xlu0 %761
    %v764 = vmul.f32 %v746, %v762
    %v765 = vadd.f32 %v559, %v764
    %v766 = vsel %vm43, %v663, 0
    %768 = vmatprep.subr.mxu0 0.0
    %769 = vmatpush1.msra.mxu0 %v141
    %770 = vmatprep.subr.mxu0 0.0
    %771 = vmatpush1.msra.mxu0 %v142
    %772 = vmatprep.subr.mxu0 0.0
    %773 = vmatpush1.msra.mxu0 0.0
    %774 = vmatprep.subr.mxu0 0.0
    %775 = vmatpush1.msra.mxu0 0.0
    %776 = vmatprep.subr.mxu0 0.0
    %777 = vmatpush1.msra.mxu0 0.0
    %778 = vmatprep.subr.mxu0 0.0
    %779 = vmatpush1.msra.mxu0 0.0
    %780 = vmatprep.subr.mxu0 0.0
    %781 = vmatpush1.msra.mxu0 0.0
    %782 = vmatprep.subr.mxu0 0.0
    %783 = vmatpush1.msra.mxu0 0.0
    %784 = vmatprep.subr.mxu0 0.0
    %785 = vmatpush1.msra.mxu0 0.0
    %786 = vmatprep.subr.mxu0 0.0
    %787 = vmatpush1.msra.mxu0 0.0
    %788 = vmatprep.subr.mxu0 0.0
    %789 = vmatpush1.msra.mxu0 0.0
    %790 = vmatprep.subr.mxu0 0.0
    %791 = vmatpush1.msra.mxu0 0.0
    %792 = vmatprep.subr.mxu0 0.0
    %793 = vmatpush1.msra.mxu0 0.0
    %794 = vmatprep.subr.mxu0 0.0
    %795 = vmatpush1.msra.mxu0 0.0
    %796 = vmatprep.subr.mxu0 0.0
    %797 = vmatpush1.msra.mxu0 0.0
    %798 = vmatprep.subr.mxu0 0.0
    %799 = vmatpush1.msra.mxu0 0.0
    %800 = vmatprep.subr.mxu0 0.0
    %801 = vmatpush1.msra.mxu0 0.0
    %802 = vmatprep.subr.mxu0 0.0
    %803 = vmatpush1.msra.mxu0 0.0
    %804 = vmatprep.subr.mxu0 0.0
    %805 = vmatpush1.msra.mxu0 0.0
    %806 = vmatprep.subr.mxu0 0.0
    %807 = vmatpush1.msra.mxu0 0.0
    %808 = vmatprep.subr.mxu0 0.0
    %809 = vmatpush1.msra.mxu0 0.0
    %810 = vmatprep.subr.mxu0 0.0
    %811 = vmatpush1.msra.mxu0 0.0
    %812 = vmatprep.subr.mxu0 0.0
    %813 = vmatpush1.msra.mxu0 0.0
    %814 = vmatprep.subr.mxu0 0.0
    %815 = vmatpush1.msra.mxu0 0.0
    %816 = vmatprep.subr.mxu0 0.0
    %817 = vmatpush1.msra.mxu0 0.0
    %818 = vmatprep.subr.mxu0 0.0
    %819 = vmatpush1.msra.mxu0 0.0
    %820 = vmatprep.subr.mxu0 0.0
    %821 = vmatpush1.msra.mxu0 0.0
    %822 = vmatprep.subr.mxu0 0.0
    %823 = vmatpush1.msra.mxu0 0.0
    %824 = vmatprep.subr.mxu0 0.0
    %825 = vmatpush1.msra.mxu0 0.0
    %826 = vmatprep.subr.mxu0 0.0
    %827 = vmatpush1.msra.mxu0 0.0
    %828 = vmatprep.subr.mxu0 0.0
    %829 = vmatpush1.msra.mxu0 0.0
    %830 = vmatprep.subr.mxu0 0.0
    %831 = vmatpush1.msra.mxu0 0.0
    %832 = vmatprep.mubr.f32.mxu0 0.0
    %833 = vmatmul.mubr.f32.gmra.mrb[0].mxu0 %v766
    %v834 = vpop.f32.mrb[0].mxu0
    %v835 = vadd.f32 0.0, %v834
    %v836 = vpop.f32.mrb[0].mxu0
    %837 = vdwg.mxu0
    %v839 = vrot.slane %v835, 4
    %v841 = vadd.f32 %v128, %v839
    %v842 = vmul.f32 %v841, 0.5
    %v843 = vtanh.pop %v842
    %v844 = vmul.f32 %v843, 0.5
    %v845 = vadd.f32 %v844, 0.5
    %v846 = vtanh.pop %v841
    %v848 = vrot.slane %v654, 4
    %v850 = vmul.f32 %v845, %v848
    %852 = vrot.lane.b32.xlu0 %v846, 96
    %v853 = vpop.permute.xlu0 %852
    %v855 = vmul.f32 %v845, %v853
    %857 = vrot.lane.b32.xlu0 %v855, 16
    %v858 = vpop.permute.xlu0 %857
    %v860 = vadd.f32 %v850, %v858
    %v861 = vtanh.pop %v860
    %863 = vrot.lane.b32.xlu0 %v861, 32
    %v864 = vpop.permute.xlu0 %863
    %v866 = vmul.f32 %v845, %v864
    %868 = vrot.lane.b32.xlu0 %v866, 80
    %v869 = vpop.permute.xlu0 %868
    %v872 = vrot.slane %v764, 4
    %873 = vrot.lane.b32.xlu0 %v872, 96
    %v874 = vpop.permute.xlu0 %873
    %v876 = vsel %vm43, %v869, %v874
    %v878 = vrot.slane %v876, 4
    %v879 = vsel %vm255, %v878, 0
    %881 = vmatprep.subr.mxu0 0.0
    %882 = vmatpush1.msra.mxu0 %v143
    %883 = vmatprep.subr.mxu0 0.0
    %884 = vmatpush1.msra.mxu0 %v144
    %885 = vmatprep.subr.mxu0 0.0
    %886 = vmatpush1.msra.mxu0 %v145
    %887 = vmatprep.subr.mxu0 0.0
    %888 = vmatpush1.msra.mxu0 %v146
    %889 = vmatprep.subr.mxu0 0.0
    %890 = vmatpush1.msra.mxu0 0.0
    %891 = vmatprep.subr.mxu0 0.0
    %892 = vmatpush1.msra.mxu0 0.0
    %893 = vmatprep.subr.mxu0 0.0
    %894 = vmatpush1.msra.mxu0 0.0
    %895 = vmatprep.subr.mxu0 0.0
    %896 = vmatpush1.msra.mxu0 0.0
    %897 = vmatprep.subr.mxu0 0.0
    %898 = vmatpush1.msra.mxu0 0.0
    %899 = vmatprep.subr.mxu0 0.0
    %900 = vmatpush1.msra.mxu0 0.0
    %901 = vmatprep.subr.mxu0 0.0
    %902 = vmatpush1.msra.mxu0 0.0
    %903 = vmatprep.subr.mxu0 0.0
    %904 = vmatpush1.msra.mxu0 0.0
    %905 = vmatprep.subr.mxu0 0.0
    %906 = vmatpush1.msra.mxu0 0.0
    %907 = vmatprep.subr.mxu0 0.0
    %908 = vmatpush1.msra.mxu0 0.0
    %909 = vmatprep.subr.mxu0 0.0
    %910 = vmatpush1.msra.mxu0 0.0
    %911 = vmatprep.subr.mxu0 0.0
    %912 = vmatpush1.msra.mxu0 0.0
    %913 = vmatprep.subr.mxu0 0.0
    %914 = vmatpush1.msra.mxu0 0.0
    %915 = vmatprep.subr.mxu0 0.0
    %916 = vmatpush1.msra.mxu0 0.0
    %917 = vmatprep.subr.mxu0 0.0
    %918 = vmatpush1.msra.mxu0 0.0
    %919 = vmatprep.subr.mxu0 0.0
    %920 = vmatpush1.msra.mxu0 0.0
    %921 = vmatprep.subr.mxu0 0.0
    %922 = vmatpush1.msra.mxu0 0.0
    %923 = vmatprep.subr.mxu0 0.0
    %924 = vmatpush1.msra.mxu0 0.0
    %925 = vmatprep.subr.mxu0 0.0
    %926 = vmatpush1.msra.mxu0 0.0
    %927 = vmatprep.subr.mxu0 0.0
    %928 = vmatpush1.msra.mxu0 0.0
    %929 = vmatprep.subr.mxu0 0.0
    %930 = vmatpush1.msra.mxu0 0.0
    %931 = vmatprep.subr.mxu0 0.0
    %932 = vmatpush1.msra.mxu0 0.0
    %933 = vmatprep.subr.mxu0 0.0
    %934 = vmatpush1.msra.mxu0 0.0
    %935 = vmatprep.subr.mxu0 0.0
    %936 = vmatpush1.msra.mxu0 0.0
    %937 = vmatprep.subr.mxu0 0.0
    %938 = vmatpush1.msra.mxu0 0.0
    %939 = vmatprep.subr.mxu0 0.0
    %940 = vmatpush1.msra.mxu0 0.0
    %941 = vmatprep.subr.mxu0 0.0
    %942 = vmatpush1.msra.mxu0 0.0
    %943 = vmatprep.subr.mxu0 0.0
    %944 = vmatpush1.msra.mxu0 0.0
    %945 = vmatprep.mubr.f32.mxu0 0.0
    %946 = vmatmul.mubr.f32.gmra.mrb[0].mxu0 %v879
    %v947 = vpop.f32.mrb[0].mxu0
    %v948 = vadd.f32 %v152, %v947
    %v949 = vpop.f32.mrb[0].mxu0
    %950 = vdwg.mxu0
    %v951 = vmul.f32 %v948, 0.5
    %v952 = vtanh.pop %v951
    %v953 = vmul.f32 %v952, 0.5
    %v954 = vadd.f32 %v953, 0.5
    %v955 = vtanh.pop %v948
    %v956 = vmul.f32 %v954, %v758
    %958 = vrot.lane.b32.xlu0 %v955, 96
    %v959 = vpop.permute.xlu0 %958
    %v961 = vmul.f32 %v954, %v959
    %963 = vrot.lane.b32.xlu0 %v961, 16
    %v964 = vpop.permute.xlu0 %963
    %v966 = vadd.f32 %v956, %v964
    %v967 = vtanh.pop %v966
    %969 = vrot.lane.b32.xlu0 %v967, 32
    %v970 = vpop.permute.xlu0 %969
    %v972 = vmul.f32 %v954, %v970
    %v973 = vadd.f32 %v765, %v972
    %v974 = vrot.slane %v866, 4
    %975 = vrot.lane.b32.xlu0 %v974, 80
    %v976 = vpop.permute.xlu0 %975
    %v977 = vsel %vm43, %v976, 0
    %979 = vmatprep.subr.mxu0 0.0
    %980 = vmatpush1.msra.mxu0 %v141
    %981 = vmatprep.subr.mxu0 0.0
    %982 = vmatpush1.msra.mxu0 %v142
    %983 = vmatprep.subr.mxu0 0.0
    %984 = vmatpush1.msra.mxu0 0.0
    %985 = vmatprep.subr.mxu0 0.0
    %986 = vmatpush1.msra.mxu0 0.0
    %987 = vmatprep.subr.mxu0 0.0
    %988 = vmatpush1.msra.mxu0 0.0
    %989 = vmatprep.subr.mxu0 0.0
    %990 = vmatpush1.msra.mxu0 0.0
    %991 = vmatprep.subr.mxu0 0.0
    %992 = vmatpush1.msra.mxu0 0.0
    %993 = vmatprep.subr.mxu0 0.0
    %994 = vmatpush1.msra.mxu0 0.0
    %995 = vmatprep.subr.mxu0 0.0
    %996 = vmatpush1.msra.mxu0 0.0
    %997 = vmatprep.subr.mxu0 0.0
    %998 = vmatpush1.msra.mxu0 0.0
    %999 = vmatprep.subr.mxu0 0.0
    %1000 = vmatpush1.msra.mxu0 0.0
    %1001 = vmatprep.subr.mxu0 0.0
    %1002 = vmatpush1.msra.mxu0 0.0
    %1003 = vmatprep.subr.mxu0 0.0
    %1004 = vmatpush1.msra.mxu0 0.0
    %1005 = vmatprep.subr.mxu0 0.0
    %1006 = vmatpush1.msra.mxu0 0.0
    %1007 = vmatprep.subr.mxu0 0.0
    %1008 = vmatpush1.msra.mxu0 0.0
    %1009 = vmatprep.subr.mxu0 0.0
    %1010 = vmatpush1.msra.mxu0 0.0
    %1011 = vmatprep.subr.mxu0 0.0
    %1012 = vmatpush1.msra.mxu0 0.0
    %1013 = vmatprep.subr.mxu0 0.0
    %1014 = vmatpush1.msra.mxu0 0.0
    %1015 = vmatprep.subr.mxu0 0.0
    %1016 = vmatpush1.msra.mxu0 0.0
    %1017 = vmatprep.subr.mxu0 0.0
    %1018 = vmatpush1.msra.mxu0 0.0
    %1019 = vmatprep.subr.mxu0 0.0
    %1020 = vmatpush1.msra.mxu0 0.0
    %1021 = vmatprep.subr.mxu0 0.0
    %1022 = vmatpush1.msra.mxu0 0.0
    %1023 = vmatprep.subr.mxu0 0.0
    %1024 = vmatpush1.msra.mxu0 0.0
    %1025 = vmatprep.subr.mxu0 0.0
    %1026 = vmatpush1.msra.mxu0 0.0
    %1027 = vmatprep.subr.mxu0 0.0
    %1028 = vmatpush1.msra.mxu0 0.0
    %1029 = vmatprep.subr.mxu0 0.0
    %1030 = vmatpush1.msra.mxu0 0.0
    %1031 = vmatprep.subr.mxu0 0.0
    %1032 = vmatpush1.msra.mxu0 0.0
    %1033 = vmatprep.subr.mxu0 0.0
    %1034 = vmatpush1.msra.mxu0 0.0
    %1035 = vmatprep.subr.mxu0 0.0
    %1036 = vmatpush1.msra.mxu0 0.0
    %1037 = vmatprep.subr.mxu0 0.0
    %1038 = vmatpush1.msra.mxu0 0.0
    %1039 = vmatprep.subr.mxu0 0.0
    %1040 = vmatpush1.msra.mxu0 0.0
    %1041 = vmatprep.subr.mxu0 0.0
    %1042 = vmatpush1.msra.mxu0 0.0
    %1043 = vmatprep.mubr.f32.mxu0 0.0
    %1044 = vmatmul.mubr.f32.gmra.mrb[0].mxu0 %v977
    %v1045 = vpop.f32.mrb[0].mxu0
    %v1046 = vadd.f32 0.0, %v1045
    %v1047 = vpop.f32.mrb[0].mxu0
    %1048 = vdwg.mxu0
    %v1049 = vadd.f32 %v133, %v1046
    %v1050 = vmul.f32 %v1049, 0.5
    %v1051 = vtanh.pop %v1050
    %v1052 = vmul.f32 %v1051, 0.5
    %v1053 = vadd.f32 %v1052, 0.5
    %v1054 = vtanh.pop %v1049
    %v1056 = vrot.slane %v860, 4
    %v1058 = vmul.f32 %v1053, %v1056
    %1060 = vrot.lane.b32.xlu0 %v1054, 96
    %v1061 = vpop.permute.xlu0 %1060
    %v1063 = vmul.f32 %v1053, %v1061
    %1065 = vrot.lane.b32.xlu0 %v1063, 16
    %v1066 = vpop.permute.xlu0 %1065
    %v1068 = vadd.f32 %v1058, %v1066
    %v1069 = vtanh.pop %v1068
    %1071 = vrot.lane.b32.xlu0 %v1069, 32
    %v1072 = vpop.permute.xlu0 %1071
    %v1074 = vmul.f32 %v1053, %v1072
    %1076 = vrot.lane.b32.xlu0 %v1074, 80
    %v1077 = vpop.permute.xlu0 %1076
    %1080 = vrot.lane.b32.xlu0 %v972, 96
    %v1081 = vpop.permute.xlu0 %1080
    %v1083 = vsel %vm43, %v1077, %v1081
    %v1085 = vsel %vm255, %v1083, 0
    %1087 = vmatprep.subr.mxu0 0.0
    %1088 = vmatpush1.msra.mxu0 %v143
    %1089 = vmatprep.subr.mxu0 0.0
    %1090 = vmatpush1.msra.mxu0 %v144
    %1091 = vmatprep.subr.mxu0 0.0
    %1092 = vmatpush1.msra.mxu0 %v145
    %1093 = vmatprep.subr.mxu0 0.0
    %1094 = vmatpush1.msra.mxu0 %v146
    %1095 = vmatprep.subr.mxu0 0.0
    %1096 = vmatpush1.msra.mxu0 0.0
    %1097 = vmatprep.subr.mxu0 0.0
    %1098 = vmatpush1.msra.mxu0 0.0
    %1099 = vmatprep.subr.mxu0 0.0
    %1100 = vmatpush1.msra.mxu0 0.0
    %1101 = vmatprep.subr.mxu0 0.0
    %1102 = vmatpush1.msra.mxu0 0.0
    %1103 = vmatprep.subr.mxu0 0.0
    %1104 = vmatpush1.msra.mxu0 0.0
    %1105 = vmatprep.subr.mxu0 0.0
    %1106 = vmatpush1.msra.mxu0 0.0
    %1107 = vmatprep.subr.mxu0 0.0
    %1108 = vmatpush1.msra.mxu0 0.0
    %1109 = vmatprep.subr.mxu0 0.0
    %1110 = vmatpush1.msra.mxu0 0.0
    %1111 = vmatprep.subr.mxu0 0.0
    %1112 = vmatpush1.msra.mxu0 0.0
    %1113 = vmatprep.subr.mxu0 0.0
    %1114 = vmatpush1.msra.mxu0 0.0
    %1115 = vmatprep.subr.mxu0 0.0
    %1116 = vmatpush1.msra.mxu0 0.0
    %1117 = vmatprep.subr.mxu0 0.0
    %1118 = vmatpush1.msra.mxu0 0.0
    %1119 = vmatprep.subr.mxu0 0.0
    %1120 = vmatpush1.msra.mxu0 0.0
    %1121 = vmatprep.subr.mxu0 0.0
    %1122 = vmatpush1.msra.mxu0 0.0
    %1123 = vmatprep.subr.mxu0 0.0
    %1124 = vmatpush1.msra.mxu0 0.0
    %1125 = vmatprep.subr.mxu0 0.0
    %1126 = vmatpush1.msra.mxu0 0.0
    %1127 = vmatprep.subr.mxu0 0.0
    %1128 = vmatpush1.msra.mxu0 0.0
    %1129 = vmatprep.subr.mxu0 0.0
    %1130 = vmatpush1.msra.mxu0 0.0
    %1131 = vmatprep.subr.mxu0 0.0
    %1132 = vmatpush1.msra.mxu0 0.0
    %1133 = vmatprep.subr.mxu0 0.0
    %1134 = vmatpush1.msra.mxu0 0.0
    %1135 = vmatprep.subr.mxu0 0.0
    %1136 = vmatpush1.msra.mxu0 0.0
    %1137 = vmatprep.subr.mxu0 0.0
    %1138 = vmatpush1.msra.mxu0 0.0
    %1139 = vmatprep.subr.mxu0 0.0
    %1140 = vmatpush1.msra.mxu0 0.0
    %1141 = vmatprep.subr.mxu0 0.0
    %1142 = vmatpush1.msra.mxu0 0.0
    %1143 = vmatprep.subr.mxu0 0.0
    %1144 = vmatpush1.msra.mxu0 0.0
    %1145 = vmatprep.subr.mxu0 0.0
    %1146 = vmatpush1.msra.mxu0 0.0
    %1147 = vmatprep.subr.mxu0 0.0
    %1148 = vmatpush1.msra.mxu0 0.0
    %1149 = vmatprep.subr.mxu0 0.0
    %1150 = vmatpush1.msra.mxu0 0.0
    %1151 = vmatprep.mubr.f32.mxu0 0.0
    %1152 = vmatmul.mubr.f32.gmra.mrb[0].mxu0 %v1085
    %v1153 = vpop.f32.mrb[0].mxu0
    %v1154 = vadd.f32 %v152, %v1153
    %v1155 = vpop.f32.mrb[0].mxu0
    %1156 = vdwg.mxu0
    %v1157 = vmul.f32 %v1154, 0.5
    %v1158 = vtanh.pop %v1157
    %v1159 = vmul.f32 %v1158, 0.5
    %v1160 = vadd.f32 %v1159, 0.5
    %v1161 = vtanh.pop %v1154
    %v1162 = vmul.f32 %v1160, %v966
    %1164 = vrot.lane.b32.xlu0 %v1161, 96
    %v1165 = vpop.permute.xlu0 %1164
    %v1167 = vmul.f32 %v1160, %v1165
    %1169 = vrot.lane.b32.xlu0 %v1167, 16
    %v1170 = vpop.permute.xlu0 %1169
    %v1172 = vadd.f32 %v1162, %v1170
    %v1173 = vtanh.pop %v1172
    %1175 = vrot.lane.b32.xlu0 %v1173, 32
    %v1176 = vpop.permute.xlu0 %1175
    %v1178 = vmul.f32 %v1160, %v1176
    %v1179 = vadd.f32 %v973, %v1178
    %v1180 = vsel %vm43, %v1077, 0
    %1182 = vmatprep.subr.mxu0 0.0
    %1183 = vmatpush1.msra.mxu0 %v141
    %1184 = vmatprep.subr.mxu0 0.0
    %1185 = vmatpush1.msra.mxu0 %v142
    %1186 = vmatprep.subr.mxu0 0.0
    %1187 = vmatpush1.msra.mxu0 0.0
    %1188 = vmatprep.subr.mxu0 0.0
    %1189 = vmatpush1.msra.mxu0 0.0
    %1190 = vmatprep.subr.mxu0 0.0
    %1191 = vmatpush1.msra.mxu0 0.0
    %1192 = vmatprep.subr.mxu0 0.0
    %1193 = vmatpush1.msra.mxu0 0.0
    %1194 = vmatprep.subr.mxu0 0.0
    %1195 = vmatpush1.msra.mxu0 0.0
    %1196 = vmatprep.subr.mxu0 0.0
    %1197 = vmatpush1.msra.mxu0 0.0
    %1198 = vmatprep.subr.mxu0 0.0
    %1199 = vmatpush1.msra.mxu0 0.0
    %1200 = vmatprep.subr.mxu0 0.0
    %1201 = vmatpush1.msra.mxu0 0.0
    %1202 = vmatprep.subr.mxu0 0.0
    %1203 = vmatpush1.msra.mxu0 0.0
    %1204 = vmatprep.subr.mxu0 0.0
    %1205 = vmatpush1.msra.mxu0 0.0
    %1206 = vmatprep.subr.mxu0 0.0
    %1207 = vmatpush1.msra.mxu0 0.0
    %1208 = vmatprep.subr.mxu0 0.0
    %1209 = vmatpush1.msra.mxu0 0.0
    %1210 = vmatprep.subr.mxu0 0.0
    %1211 = vmatpush1.msra.mxu0 0.0
    %1212 = vmatprep.subr.mxu0 0.0
    %1213 = vmatpush1.msra.mxu0 0.0
    %1214 = vmatprep.subr.mxu0 0.0
    %1215 = vmatpush1.msra.mxu0 0.0
    %1216 = vmatprep.subr.mxu0 0.0
    %1217 = vmatpush1.msra.mxu0 0.0
    %1218 = vmatprep.subr.mxu0 0.0
    %1219 = vmatpush1.msra.mxu0 0.0
    %1220 = vmatprep.subr.mxu0 0.0
    %1221 = vmatpush1.msra.mxu0 0.0
    %1222 = vmatprep.subr.mxu0 0.0
    %1223 = vmatpush1.msra.mxu0 0.0
    %1224 = vmatprep.subr.mxu0 0.0
    %1225 = vmatpush1.msra.mxu0 0.0
    %1226 = vmatprep.subr.mxu0 0.0
    %1227 = vmatpush1.msra.mxu0 0.0
    %1228 = vmatprep.subr.mxu0 0.0
    %1229 = vmatpush1.msra.mxu0 0.0
    %1230 = vmatprep.subr.mxu0 0.0
    %1231 = vmatpush1.msra.mxu0 0.0
    %1232 = vmatprep.subr.mxu0 0.0
    %1233 = vmatpush1.msra.mxu0 0.0
    %1234 = vmatprep.subr.mxu0 0.0
    %1235 = vmatpush1.msra.mxu0 0.0
    %1236 = vmatprep.subr.mxu0 0.0
    %1237 = vmatpush1.msra.mxu0 0.0
    %1238 = vmatprep.subr.mxu0 0.0
    %1239 = vmatpush1.msra.mxu0 0.0
    %1240 = vmatprep.subr.mxu0 0.0
    %1241 = vmatpush1.msra.mxu0 0.0
    %1242 = vmatprep.subr.mxu0 0.0
    %1243 = vmatpush1.msra.mxu0 0.0
    %1244 = vmatprep.subr.mxu0 0.0
    %1245 = vmatpush1.msra.mxu0 0.0
    %1246 = vmatprep.mubr.f32.mxu0 0.0
    %1247 = vmatmul.mubr.f32.gmra.mrb[0].mxu0 %v1180
    %v1248 = vpop.f32.mrb[0].mxu0
    %v1249 = vadd.f32 0.0, %v1248
    %v1250 = vpop.f32.mrb[0].mxu0
    %1251 = vdwg.mxu0
    %v1253 = vrot.slane %v1249, 4
    %v1255 = vadd.f32 %v133, %v1253
    %v1256 = vmul.f32 %v1255, 0.5
    %v1257 = vtanh.pop %v1256
    %v1258 = vmul.f32 %v1257, 0.5
    %v1259 = vadd.f32 %v1258, 0.5
    %v1260 = vtanh.pop %v1255
    %v1262 = vrot.slane %v1068, 4
    %v1264 = vmul.f32 %v1259, %v1262
    %1266 = vrot.lane.b32.xlu0 %v1260, 96
    %v1267 = vpop.permute.xlu0 %1266
    %v1269 = vmul.f32 %v1259, %v1267
    %1271 = vrot.lane.b32.xlu0 %v1269, 16
    %v1272 = vpop.permute.xlu0 %1271
    %v1274 = vadd.f32 %v1264, %v1272
    %v1275 = vtanh.pop %v1274
    %1277 = vrot.lane.b32.xlu0 %v1275, 32
    %v1278 = vpop.permute.xlu0 %1277
    %v1280 = vmul.f32 %v1259, %v1278
    %1282 = vrot.lane.b32.xlu0 %v1280, 80
    %v1283 = vpop.permute.xlu0 %1282
    %v1286 = vrot.slane %v1178, 4
    %1287 = vrot.lane.b32.xlu0 %v1286, 96
    %v1288 = vpop.permute.xlu0 %1287
    %v1290 = vsel %vm43, %v1283, %v1288
    %v1292 = vrot.slane %v1290, 4
    %v1293 = vsel %vm255, %v1292, 0
    %1295 = vmatprep.subr.mxu0 0.0
    %1296 = vmatpush1.msra.mxu0 %v143
    %1297 = vmatprep.subr.mxu0 0.0
    %1298 = vmatpush1.msra.mxu0 %v144
    %1299 = vmatprep.subr.mxu0 0.0
    %1300 = vmatpush1.msra.mxu0 %v145
    %1301 = vmatprep.subr.mxu0 0.0
    %1302 = vmatpush1.msra.mxu0 %v146
    %1303 = vmatprep.subr.mxu0 0.0
    %1304 = vmatpush1.msra.mxu0 0.0
    %1305 = vmatprep.subr.mxu0 0.0
    %1306 = vmatpush1.msra.mxu0 0.0
    %1307 = vmatprep.subr.mxu0 0.0
    %1308 = vmatpush1.msra.mxu0 0.0
    %1309 = vmatprep.subr.mxu0 0.0
    %1310 = vmatpush1.msra.mxu0 0.0
    %1311 = vmatprep.subr.mxu0 0.0
    %1312 = vmatpush1.msra.mxu0 0.0
    %1313 = vmatprep.subr.mxu0 0.0
    %1314 = vmatpush1.msra.mxu0 0.0
    %1315 = vmatprep.subr.mxu0 0.0
    %1316 = vmatpush1.msra.mxu0 0.0
    %1317 = vmatprep.subr.mxu0 0.0
    %1318 = vmatpush1.msra.mxu0 0.0
    %1319 = vmatprep.subr.mxu0 0.0
    %1320 = vmatpush1.msra.mxu0 0.0
    %1321 = vmatprep.subr.mxu0 0.0
    %1322 = vmatpush1.msra.mxu0 0.0
    %1323 = vmatprep.subr.mxu0 0.0
    %1324 = vmatpush1.msra.mxu0 0.0
    %1325 = vmatprep.subr.mxu0 0.0
    %1326 = vmatpush1.msra.mxu0 0.0
    %1327 = vmatprep.subr.mxu0 0.0
    %1328 = vmatpush1.msra.mxu0 0.0
    %1329 = vmatprep.subr.mxu0 0.0
    %1330 = vmatpush1.msra.mxu0 0.0
    %1331 = vmatprep.subr.mxu0 0.0
    %1332 = vmatpush1.msra.mxu0 0.0
    %1333 = vmatprep.subr.mxu0 0.0
    %1334 = vmatpush1.msra.mxu0 0.0
    %1335 = vmatprep.subr.mxu0 0.0
    %1336 = vmatpush1.msra.mxu0 0.0
    %1337 = vmatprep.subr.mxu0 0.0
    %1338 = vmatpush1.msra.mxu0 0.0
    %1339 = vmatprep.subr.mxu0 0.0
    %1340 = vmatpush1.msra.mxu0 0.0
    %1341 = vmatprep.subr.mxu0 0.0
    %1342 = vmatpush1.msra.mxu0 0.0
    %1343 = vmatprep.subr.mxu0 0.0
    %1344 = vmatpush1.msra.mxu0 0.0
    %1345 = vmatprep.subr.mxu0 0.0
    %1346 = vmatpush1.msra.mxu0 0.0
    %1347 = vmatprep.subr.mxu0 0.0
    %1348 = vmatpush1.msra.mxu0 0.0
    %1349 = vmatprep.subr.mxu0 0.0
    %1350 = vmatpush1.msra.mxu0 0.0
    %1351 = vmatprep.subr.mxu0 0.0
    %1352 = vmatpush1.msra.mxu0 0.0
    %1353 = vmatprep.subr.mxu0 0.0
    %1354 = vmatpush1.msra.mxu0 0.0
    %1355 = vmatprep.subr.mxu0 0.0
    %1356 = vmatpush1.msra.mxu0 0.0
    %1357 = vmatprep.subr.mxu0 0.0
    %1358 = vmatpush1.msra.mxu0 0.0
    %1359 = vmatprep.mubr.f32.mxu0 0.0
    %1360 = vmatmul.mubr.f32.gmra.mrb[0].mxu0 %v1293
    %v1361 = vpop.f32.mrb[0].mxu0
    %v1362 = vadd.f32 %v152, %v1361
    %v1363 = vpop.f32.mrb[0].mxu0
    %1364 = vdwg.mxu0
    %v1365 = vmul.f32 %v1362, 0.5
    %v1366 = vtanh.pop %v1365
    %v1367 = vmul.f32 %v1366, 0.5
    %v1368 = vadd.f32 %v1367, 0.5
    %v1369 = vtanh.pop %v1362
    %v1370 = vmul.f32 %v1368, %v1172
    %1372 = vrot.lane.b32.xlu0 %v1369, 96
    %v1373 = vpop.permute.xlu0 %1372
    %v1375 = vmul.f32 %v1368, %v1373
    %1377 = vrot.lane.b32.xlu0 %v1375, 16
    %v1378 = vpop.permute.xlu0 %1377
    %v1380 = vadd.f32 %v1370, %v1378
    %v1381 = vtanh.pop %v1380
    %1383 = vrot.lane.b32.xlu0 %v1381, 32
    %v1384 = vpop.permute.xlu0 %1383
    %v1386 = vmul.f32 %v1368, %v1384
    %v1387 = vadd.f32 %v1179, %v1386
    %v1388 = vrot.slane %v1280, 4
    %1389 = vrot.lane.b32.xlu0 %v1388, 80
    %v1390 = vpop.permute.xlu0 %1389
    %v1391 = vsel %vm43, %v1390, 0
    %1393 = vmatprep.subr.mxu0 0.0
    %1394 = vmatpush1.msra.mxu0 %v141
    %1395 = vmatprep.subr.mxu0 0.0
    %1396 = vmatpush1.msra.mxu0 %v142
    %1397 = vmatprep.subr.mxu0 0.0
    %1398 = vmatpush1.msra.mxu0 0.0
    %1399 = vmatprep.subr.mxu0 0.0
    %1400 = vmatpush1.msra.mxu0 0.0
    %1401 = vmatprep.subr.mxu0 0.0
    %1402 = vmatpush1.msra.mxu0 0.0
    %1403 = vmatprep.subr.mxu0 0.0
    %1404 = vmatpush1.msra.mxu0 0.0
    %1405 = vmatprep.subr.mxu0 0.0
    %1406 = vmatpush1.msra.mxu0 0.0
    %1407 = vmatprep.subr.mxu0 0.0
    %1408 = vmatpush1.msra.mxu0 0.0
    %1409 = vmatprep.subr.mxu0 0.0
    %1410 = vmatpush1.msra.mxu0 0.0
    %1411 = vmatprep.subr.mxu0 0.0
    %1412 = vmatpush1.msra.mxu0 0.0
    %1413 = vmatprep.subr.mxu0 0.0
    %1414 = vmatpush1.msra.mxu0 0.0
    %1415 = vmatprep.subr.mxu0 0.0
    %1416 = vmatpush1.msra.mxu0 0.0
    %1417 = vmatprep.subr.mxu0 0.0
    %1418 = vmatpush1.msra.mxu0 0.0
    %1419 = vmatprep.subr.mxu0 0.0
    %1420 = vmatpush1.msra.mxu0 0.0
    %1421 = vmatprep.subr.mxu0 0.0
    %1422 = vmatpush1.msra.mxu0 0.0
    %1423 = vmatprep.subr.mxu0 0.0
    %1424 = vmatpush1.msra.mxu0 0.0
    %1425 = vmatprep.subr.mxu0 0.0
    %1426 = vmatpush1.msra.mxu0 0.0
    %1427 = vmatprep.subr.mxu0 0.0
    %1428 = vmatpush1.msra.mxu0 0.0
    %1429 = vmatprep.subr.mxu0 0.0
    %1430 = vmatpush1.msra.mxu0 0.0
    %1431 = vmatprep.subr.mxu0 0.0
    %1432 = vmatpush1.msra.mxu0 0.0
    %1433 = vmatprep.subr.mxu0 0.0
    %1434 = vmatpush1.msra.mxu0 0.0
    %1435 = vmatprep.subr.mxu0 0.0
    %1436 = vmatpush1.msra.mxu0 0.0
    %1437 = vmatprep.subr.mxu0 0.0
    %1438 = vmatpush1.msra.mxu0 0.0
    %1439 = vmatprep.subr.mxu0 0.0
    %1440 = vmatpush1.msra.mxu0 0.0
    %1441 = vmatprep.subr.mxu0 0.0
    %1442 = vmatpush1.msra.mxu0 0.0
    %1443 = vmatprep.subr.mxu0 0.0
    %1444 = vmatpush1.msra.mxu0 0.0
    %1445 = vmatprep.subr.mxu0 0.0
    %1446 = vmatpush1.msra.mxu0 0.0
    %1447 = vmatprep.subr.mxu0 0.0
    %1448 = vmatpush1.msra.mxu0 0.0
    %1449 = vmatprep.subr.mxu0 0.0
    %1450 = vmatpush1.msra.mxu0 0.0
    %1451 = vmatprep.subr.mxu0 0.0
    %1452 = vmatpush1.msra.mxu0 0.0
    %1453 = vmatprep.subr.mxu0 0.0
    %1454 = vmatpush1.msra.mxu0 0.0
    %1455 = vmatprep.subr.mxu0 0.0
    %1456 = vmatpush1.msra.mxu0 0.0
    %1457 = vmatprep.mubr.f32.mxu0 0.0
    %1458 = vmatmul.mubr.f32.gmra.mrb[0].mxu0 %v1391
    %v1459 = vpop.f32.mrb[0].mxu0
    %v1460 = vadd.f32 0.0, %v1459
    %v1461 = vpop.f32.mrb[0].mxu0
    %1462 = vdwg.mxu0
    %v1463 = vadd.f32 %v138, %v1460
    %v1464 = vmul.f32 %v1463, 0.5
    %v1465 = vtanh.pop %v1464
    %v1466 = vmul.f32 %v1465, 0.5
    %v1467 = vadd.f32 %v1466, 0.5
    %v1468 = vtanh.pop %v1463
    %v1470 = vrot.slane %v1274, 4
    %v1472 = vmul.f32 %v1467, %v1470
    %1474 = vrot.lane.b32.xlu0 %v1468, 96
    %v1475 = vpop.permute.xlu0 %1474
    %v1477 = vmul.f32 %v1467, %v1475
    %1479 = vrot.lane.b32.xlu0 %v1477, 16
    %v1480 = vpop.permute.xlu0 %1479
    %v1482 = vadd.f32 %v1472, %v1480
    %v1483 = vtanh.pop %v1482
    %1485 = vrot.lane.b32.xlu0 %v1483, 32
    %v1486 = vpop.permute.xlu0 %1485
    %v1488 = vmul.f32 %v1467, %v1486
    %1490 = vrot.lane.b32.xlu0 %v1488, 80
    %v1491 = vpop.permute.xlu0 %1490
    %1494 = vrot.lane.b32.xlu0 %v1386, 96
    %v1495 = vpop.permute.xlu0 %1494
    %v1497 = vsel %vm43, %v1491, %v1495
    %v1499 = vsel %vm255, %v1497, 0
    %1501 = vmatprep.subr.mxu0 0.0
    %1502 = vmatpush1.msra.mxu0 %v143
    %1503 = vmatprep.subr.mxu0 0.0
    %1504 = vmatpush1.msra.mxu0 %v144
    %1505 = vmatprep.subr.mxu0 0.0
    %1506 = vmatpush1.msra.mxu0 %v145
    %1507 = vmatprep.subr.mxu0 0.0
    %1508 = vmatpush1.msra.mxu0 %v146
    %1509 = vmatprep.subr.mxu0 0.0
    %1510 = vmatpush1.msra.mxu0 0.0
    %1511 = vmatprep.subr.mxu0 0.0
    %1512 = vmatpush1.msra.mxu0 0.0
    %1513 = vmatprep.subr.mxu0 0.0
    %1514 = vmatpush1.msra.mxu0 0.0
    %1515 = vmatprep.subr.mxu0 0.0
    %1516 = vmatpush1.msra.mxu0 0.0
    %1517 = vmatprep.subr.mxu0 0.0
    %1518 = vmatpush1.msra.mxu0 0.0
    %1519 = vmatprep.subr.mxu0 0.0
    %1520 = vmatpush1.msra.mxu0 0.0
    %1521 = vmatprep.subr.mxu0 0.0
    %1522 = vmatpush1.msra.mxu0 0.0
    %1523 = vmatprep.subr.mxu0 0.0
    %1524 = vmatpush1.msra.mxu0 0.0
    %1525 = vmatprep.subr.mxu0 0.0
    %1526 = vmatpush1.msra.mxu0 0.0
    %1527 = vmatprep.subr.mxu0 0.0
    %1528 = vmatpush1.msra.mxu0 0.0
    %1529 = vmatprep.subr.mxu0 0.0
    %1530 = vmatpush1.msra.mxu0 0.0
    %1531 = vmatprep.subr.mxu0 0.0
    %1532 = vmatpush1.msra.mxu0 0.0
    %1533 = vmatprep.subr.mxu0 0.0
    %1534 = vmatpush1.msra.mxu0 0.0
    %1535 = vmatprep.subr.mxu0 0.0
    %1536 = vmatpush1.msra.mxu0 0.0
    %1537 = vmatprep.subr.mxu0 0.0
    %1538 = vmatpush1.msra.mxu0 0.0
    %1539 = vmatprep.subr.mxu0 0.0
    %1540 = vmatpush1.msra.mxu0 0.0
    %1541 = vmatprep.subr.mxu0 0.0
    %1542 = vmatpush1.msra.mxu0 0.0
    %1543 = vmatprep.subr.mxu0 0.0
    %1544 = vmatpush1.msra.mxu0 0.0
    %1545 = vmatprep.subr.mxu0 0.0
    %1546 = vmatpush1.msra.mxu0 0.0
    %1547 = vmatprep.subr.mxu0 0.0
    %1548 = vmatpush1.msra.mxu0 0.0
    %1549 = vmatprep.subr.mxu0 0.0
    %1550 = vmatpush1.msra.mxu0 0.0
    %1551 = vmatprep.subr.mxu0 0.0
    %1552 = vmatpush1.msra.mxu0 0.0
    %1553 = vmatprep.subr.mxu0 0.0
    %1554 = vmatpush1.msra.mxu0 0.0
    %1555 = vmatprep.subr.mxu0 0.0
    %1556 = vmatpush1.msra.mxu0 0.0
    %1557 = vmatprep.subr.mxu0 0.0
    %1558 = vmatpush1.msra.mxu0 0.0
    %1559 = vmatprep.subr.mxu0 0.0
    %1560 = vmatpush1.msra.mxu0 0.0
    %1561 = vmatprep.subr.mxu0 0.0
    %1562 = vmatpush1.msra.mxu0 0.0
    %1563 = vmatprep.subr.mxu0 0.0
    %1564 = vmatpush1.msra.mxu0 0.0
    %1565 = vmatprep.mubr.f32.mxu0 0.0
    %1566 = vmatmul.mubr.f32.gmra.mrb[0].mxu0 %v1499
    %v1567 = vpop.f32.mrb[0].mxu0
    %v1568 = vadd.f32 %v152, %v1567
    %v1569 = vpop.f32.mrb[0].mxu0
    %1570 = vdwg.mxu0
    %v1571 = vmul.f32 %v1568, 0.5
    %v1572 = vtanh.pop %v1571
    %v1573 = vmul.f32 %v1572, 0.5
    %v1574 = vadd.f32 %v1573, 0.5
    %v1575 = vtanh.pop %v1568
    %v1576 = vmul.f32 %v1574, %v1380
    %1578 = vrot.lane.b32.xlu0 %v1575, 96
    %v1579 = vpop.permute.xlu0 %1578
    %v1581 = vmul.f32 %v1574, %v1579
    %1583 = vrot.lane.b32.xlu0 %v1581, 16
    %v1584 = vpop.permute.xlu0 %1583
    %v1586 = vadd.f32 %v1576, %v1584
    %v1587 = vtanh.pop %v1586
    %1589 = vrot.lane.b32.xlu0 %v1587, 32
    %v1590 = vpop.permute.xlu0 %1589
    %v1592 = vmul.f32 %v1574, %v1590
    %v1593 = vadd.f32 %v1387, %v1592
    %v1594 = vsel %vm43, %v1491, 0
    %1596 = vmatprep.subr.mxu0 0.0
    %1597 = vmatpush1.msra.mxu0 %v141
    %1598 = vmatprep.subr.mxu0 0.0
    %1599 = vmatpush1.msra.mxu0 %v142
    %1600 = vmatprep.subr.mxu0 0.0
    %1601 = vmatpush1.msra.mxu0 0.0
    %1602 = vmatprep.subr.mxu0 0.0
    %1603 = vmatpush1.msra.mxu0 0.0
    %1604 = vmatprep.subr.mxu0 0.0
    %1605 = vmatpush1.msra.mxu0 0.0
    %1606 = vmatprep.subr.mxu0 0.0
    %1607 = vmatpush1.msra.mxu0 0.0
    %1608 = vmatprep.subr.mxu0 0.0
    %1609 = vmatpush1.msra.mxu0 0.0
    %1610 = vmatprep.subr.mxu0 0.0
    %1611 = vmatpush1.msra.mxu0 0.0
    %1612 = vmatprep.subr.mxu0 0.0
    %1613 = vmatpush1.msra.mxu0 0.0
    %1614 = vmatprep.subr.mxu0 0.0
    %1615 = vmatpush1.msra.mxu0 0.0
    %1616 = vmatprep.subr.mxu0 0.0
    %1617 = vmatpush1.msra.mxu0 0.0
    %1618 = vmatprep.subr.mxu0 0.0
    %1619 = vmatpush1.msra.mxu0 0.0
    %1620 = vmatprep.subr.mxu0 0.0
    %1621 = vmatpush1.msra.mxu0 0.0
    %1622 = vmatprep.subr.mxu0 0.0
    %1623 = vmatpush1.msra.mxu0 0.0
    %1624 = vmatprep.subr.mxu0 0.0
    %1625 = vmatpush1.msra.mxu0 0.0
    %1626 = vmatprep.subr.mxu0 0.0
    %1627 = vmatpush1.msra.mxu0 0.0
    %1628 = vmatprep.subr.mxu0 0.0
    %1629 = vmatpush1.msra.mxu0 0.0
    %1630 = vmatprep.subr.mxu0 0.0
    %1631 = vmatpush1.msra.mxu0 0.0
    %1632 = vmatprep.subr.mxu0 0.0
    %1633 = vmatpush1.msra.mxu0 0.0
    %1634 = vmatprep.subr.mxu0 0.0
    %1635 = vmatpush1.msra.mxu0 0.0
    %1636 = vmatprep.subr.mxu0 0.0
    %1637 = vmatpush1.msra.mxu0 0.0
    %1638 = vmatprep.subr.mxu0 0.0
    %1639 = vmatpush1.msra.mxu0 0.0
    %1640 = vmatprep.subr.mxu0 0.0
    %1641 = vmatpush1.msra.mxu0 0.0
    %1642 = vmatprep.subr.mxu0 0.0
    %1643 = vmatpush1.msra.mxu0 0.0
    %1644 = vmatprep.subr.mxu0 0.0
    %1645 = vmatpush1.msra.mxu0 0.0
    %1646 = vmatprep.subr.mxu0 0.0
    %1647 = vmatpush1.msra.mxu0 0.0
    %1648 = vmatprep.subr.mxu0 0.0
    %1649 = vmatpush1.msra.mxu0 0.0
    %1650 = vmatprep.subr.mxu0 0.0
    %1651 = vmatpush1.msra.mxu0 0.0
    %1652 = vmatprep.subr.mxu0 0.0
    %1653 = vmatpush1.msra.mxu0 0.0
    %1654 = vmatprep.subr.mxu0 0.0
    %1655 = vmatpush1.msra.mxu0 0.0
    %1656 = vmatprep.subr.mxu0 0.0
    %1657 = vmatpush1.msra.mxu0 0.0
    %1658 = vmatprep.subr.mxu0 0.0
    %1659 = vmatpush1.msra.mxu0 0.0
    %1660 = vmatprep.mubr.f32.mxu0 0.0
    %1661 = vmatmul.mubr.f32.gmra.mrb[0].mxu0 %v1594
    %v1662 = vpop.f32.mrb[0].mxu0
    %v1663 = vadd.f32 0.0, %v1662
    %v1664 = vpop.f32.mrb[0].mxu0
    %1665 = vdwg.mxu0
    %v1667 = vrot.slane %v1663, 4
    %v1669 = vadd.f32 %v138, %v1667
    %v1670 = vmul.f32 %v1669, 0.5
    %v1671 = vtanh.pop %v1670
    %v1672 = vmul.f32 %v1671, 0.5
    %v1673 = vadd.f32 %v1672, 0.5
    %v1674 = vtanh.pop %v1669
    %v1676 = vrot.slane %v1482, 4
    %v1678 = vmul.f32 %v1673, %v1676
    %1680 = vrot.lane.b32.xlu0 %v1674, 96
    %v1681 = vpop.permute.xlu0 %1680
    %v1683 = vmul.f32 %v1673, %v1681
    %1685 = vrot.lane.b32.xlu0 %v1683, 16
    %v1686 = vpop.permute.xlu0 %1685
    %v1688 = vadd.f32 %v1678, %v1686
    %v1689 = vtanh.pop %v1688
    %1691 = vrot.lane.b32.xlu0 %v1689, 32
    %v1692 = vpop.permute.xlu0 %1691
    %v1694 = vmul.f32 %v1673, %v1692
    %1696 = vrot.lane.b32.xlu0 %v1694, 80
    %v1697 = vpop.permute.xlu0 %1696
    %v1700 = vrot.slane %v1592, 4
    %1701 = vrot.lane.b32.xlu0 %v1700, 96
    %v1702 = vpop.permute.xlu0 %1701
    %v1704 = vsel %vm43, %v1697, %v1702
    %v1706 = vrot.slane %v1704, 4
    %v1707 = vsel %vm255, %v1706, 0
    %1709 = vmatprep.subr.mxu0 0.0
    %1710 = vmatpush1.msra.mxu0 %v143
    %1711 = vmatprep.subr.mxu0 0.0
    %1712 = vmatpush1.msra.mxu0 %v144
    %1713 = vmatprep.subr.mxu0 0.0
    %1714 = vmatpush1.msra.mxu0 %v145
    %1715 = vmatprep.subr.mxu0 0.0
    %1716 = vmatpush1.msra.mxu0 %v146
    %1717 = vmatprep.subr.mxu0 0.0
    %1718 = vmatpush1.msra.mxu0 0.0
    %1719 = vmatprep.subr.mxu0 0.0
    %1720 = vmatpush1.msra.mxu0 0.0
    %1721 = vmatprep.subr.mxu0 0.0
    %1722 = vmatpush1.msra.mxu0 0.0
    %1723 = vmatprep.subr.mxu0 0.0
    %1724 = vmatpush1.msra.mxu0 0.0
    %1725 = vmatprep.subr.mxu0 0.0
    %1726 = vmatpush1.msra.mxu0 0.0
    %1727 = vmatprep.subr.mxu0 0.0
    %1728 = vmatpush1.msra.mxu0 0.0
    %1729 = vmatprep.subr.mxu0 0.0
    %1730 = vmatpush1.msra.mxu0 0.0
    %1731 = vmatprep.subr.mxu0 0.0
    %1732 = vmatpush1.msra.mxu0 0.0
    %1733 = vmatprep.subr.mxu0 0.0
    %1734 = vmatpush1.msra.mxu0 0.0
    %1735 = vmatprep.subr.mxu0 0.0
    %1736 = vmatpush1.msra.mxu0 0.0
    %1737 = vmatprep.subr.mxu0 0.0
    %1738 = vmatpush1.msra.mxu0 0.0
    %1739 = vmatprep.subr.mxu0 0.0
    %1740 = vmatpush1.msra.mxu0 0.0
    %1741 = vmatprep.subr.mxu0 0.0
    %1742 = vmatpush1.msra.mxu0 0.0
    %1743 = vmatprep.subr.mxu0 0.0
    %1744 = vmatpush1.msra.mxu0 0.0
    %1745 = vmatprep.subr.mxu0 0.0
    %1746 = vmatpush1.msra.mxu0 0.0
    %1747 = vmatprep.subr.mxu0 0.0
    %1748 = vmatpush1.msra.mxu0 0.0
    %1749 = vmatprep.subr.mxu0 0.0
    %1750 = vmatpush1.msra.mxu0 0.0
    %1751 = vmatprep.subr.mxu0 0.0
    %1752 = vmatpush1.msra.mxu0 0.0
    %1753 = vmatprep.subr.mxu0 0.0
    %1754 = vmatpush1.msra.mxu0 0.0
    %1755 = vmatprep.subr.mxu0 0.0
    %1756 = vmatpush1.msra.mxu0 0.0
    %1757 = vmatprep.subr.mxu0 0.0
    %1758 = vmatpush1.msra.mxu0 0.0
    %1759 = vmatprep.subr.mxu0 0.0
    %1760 = vmatpush1.msra.mxu0 0.0
    %1761 = vmatprep.subr.mxu0 0.0
    %1762 = vmatpush1.msra.mxu0 0.0
    %1763 = vmatprep.subr.mxu0 0.0
    %1764 = vmatpush1.msra.mxu0 0.0
    %1765 = vmatprep.subr.mxu0 0.0
    %1766 = vmatpush1.msra.mxu0 0.0
    %1767 = vmatprep.subr.mxu0 0.0
    %1768 = vmatpush1.msra.mxu0 0.0
    %1769 = vmatprep.subr.mxu0 0.0
    %1770 = vmatpush1.msra.mxu0 0.0
    %1771 = vmatprep.subr.mxu0 0.0
    %1772 = vmatpush1.msra.mxu0 0.0
    %1773 = vmatprep.mubr.f32.mxu0 0.0
    %1774 = vmatmul.mubr.f32.gmra.mrb[0].mxu0 %v1707
    %v1775 = vpop.f32.mrb[0].mxu0
    %v1776 = vadd.f32 %v152, %v1775
    %v1777 = vpop.f32.mrb[0].mxu0
    %1778 = vdwg.mxu0
    %v1779 = vmul.f32 %v1776, 0.5
    %v1780 = vtanh.pop %v1779
    %v1781 = vmul.f32 %v1780, 0.5
    %v1782 = vadd.f32 %v1781, 0.5
    %v1783 = vtanh.pop %v1776
    %v1784 = vmul.f32 %v1782, %v1586
    %1786 = vrot.lane.b32.xlu0 %v1783, 96
    %v1787 = vpop.permute.xlu0 %1786
    %v1789 = vmul.f32 %v1782, %v1787
    %1791 = vrot.lane.b32.xlu0 %v1789, 16
    %v1792 = vpop.permute.xlu0 %1791
    %v1794 = vadd.f32 %v1784, %v1792
    %v1795 = vtanh.pop %v1794
    %1797 = vrot.lane.b32.xlu0 %v1795, 32
    %v1798 = vpop.permute.xlu0 %1797
    %v1800 = vmul.f32 %v1782, %v1798
    %v1801 = vadd.f32 %v1593, %v1800
    %v1802 = vld [vmem:[%s6] sm:$0xff]
    %v1803 = vld [vmem:[%s6 + $0x8] sm:$0xff]
    %v1804 = vld [vmem:[%s7] sm:$0x1]
    %v1806 = vlaneseq
    %v1807 = vshrl.u32 %v1806, 7
    %v1808 = vsub.s32 0, %v1807
    %v1809 = vrot.slane %v1804, %v1808
    %1812 = vrot.lane.b32.xlu0 %v1801, 80
    %v1813 = vpop.permute.xlu0 %1812
    %v1814 = vsel %vm43, %v1813, 0
    %1816 = vmatprep.subr.mxu0 0.0
    %1817 = vmatpush1.msra.mxu0 %v1802
    %1818 = vmatprep.subr.mxu0 0.0
    %1819 = vmatpush1.msra.mxu0 %v1803
    %1820 = vmatprep.subr.mxu0 0.0
    %1821 = vmatpush1.msra.mxu0 0.0
    %1822 = vmatprep.subr.mxu0 0.0
    %1823 = vmatpush1.msra.mxu0 0.0
    %1824 = vmatprep.subr.mxu0 0.0
    %1825 = vmatpush1.msra.mxu0 0.0
    %1826 = vmatprep.subr.mxu0 0.0
    %1827 = vmatpush1.msra.mxu0 0.0
    %1828 = vmatprep.subr.mxu0 0.0
    %1829 = vmatpush1.msra.mxu0 0.0
    %1830 = vmatprep.subr.mxu0 0.0
    %1831 = vmatpush1.msra.mxu0 0.0
    %1832 = vmatprep.subr.mxu0 0.0
    %1833 = vmatpush1.msra.mxu0 0.0
    %1834 = vmatprep.subr.mxu0 0.0
    %1835 = vmatpush1.msra.mxu0 0.0
    %1836 = vmatprep.subr.mxu0 0.0
    %1837 = vmatpush1.msra.mxu0 0.0
    %1838 = vmatprep.subr.mxu0 0.0
    %1839 = vmatpush1.msra.mxu0 0.0
    %1840 = vmatprep.subr.mxu0 0.0
    %1841 = vmatpush1.msra.mxu0 0.0
    %1842 = vmatprep.subr.mxu0 0.0
    %1843 = vmatpush1.msra.mxu0 0.0
    %1844 = vmatprep.subr.mxu0 0.0
    %1845 = vmatpush1.msra.mxu0 0.0
    %1846 = vmatprep.subr.mxu0 0.0
    %1847 = vmatpush1.msra.mxu0 0.0
    %1848 = vmatprep.subr.mxu0 0.0
    %1849 = vmatpush1.msra.mxu0 0.0
    %1850 = vmatprep.subr.mxu0 0.0
    %1851 = vmatpush1.msra.mxu0 0.0
    %1852 = vmatprep.subr.mxu0 0.0
    %1853 = vmatpush1.msra.mxu0 0.0
    %1854 = vmatprep.subr.mxu0 0.0
    %1855 = vmatpush1.msra.mxu0 0.0
    %1856 = vmatprep.subr.mxu0 0.0
    %1857 = vmatpush1.msra.mxu0 0.0
    %1858 = vmatprep.subr.mxu0 0.0
    %1859 = vmatpush1.msra.mxu0 0.0
    %1860 = vmatprep.subr.mxu0 0.0
    %1861 = vmatpush1.msra.mxu0 0.0
    %1862 = vmatprep.subr.mxu0 0.0
    %1863 = vmatpush1.msra.mxu0 0.0
    %1864 = vmatprep.subr.mxu0 0.0
    %1865 = vmatpush1.msra.mxu0 0.0
    %1866 = vmatprep.subr.mxu0 0.0
    %1867 = vmatpush1.msra.mxu0 0.0
    %1868 = vmatprep.subr.mxu0 0.0
    %1869 = vmatpush1.msra.mxu0 0.0
    %1870 = vmatprep.subr.mxu0 0.0
    %1871 = vmatpush1.msra.mxu0 0.0
    %1872 = vmatprep.subr.mxu0 0.0
    %1873 = vmatpush1.msra.mxu0 0.0
    %1874 = vmatprep.subr.mxu0 0.0
    %1875 = vmatpush1.msra.mxu0 0.0
    %1876 = vmatprep.subr.mxu0 0.0
    %1877 = vmatpush1.msra.mxu0 0.0
    %1878 = vmatprep.subr.mxu0 0.0
    %1879 = vmatpush1.msra.mxu0 0.0
    %1880 = vmatprep.mubr.f32.mxu0 0.0
    %1881 = vmatmul.mubr.f32.gmra.mrb[0].mxu0 %v1814
    %v1882 = vpop.f32.mrb[0].mxu0
    %v1883 = vadd.f32 %v1809, %v1882
    %v1884 = vpop.f32.mrb[0].mxu0
    %1885 = vdwg.mxu0
    %v1886 = vmax.f32 %v1883, 0.0
    %vm1887 = vcmask 60416
    %1888 = vst.msk [vmem:[#allocation2] sm:$0xf] %vm1887, %v1886
    // Predicated region
    $region34: #{tpu_custom_call.1} parent=1 // pred_check
      _
    $region35: #{tpu_custom_call.1} parent=1 // pred_check_branch
      %1890 = sbr.rel (0) target = $region37
    $region36: #{tpu_custom_call.1} parent=1 // pred_region
      %s1892 = ssub.s32 64, 64
      %1893 = vsyncadd [#allocation3], %s1892
      %s1895 = sshll.u32 [#allocation2], 4
      %s1896 = int_to_ptr.vmem [resolvable:$true] %s1895
      %1898 = dma.vmem_to_hbm [thread:$0]  %s1896, 64, %s8, [#allocation3]
    $region37: #{tpu_custom_call.1} parent=1 // pred_fallthru
      _
    // Predicated region
    $region38: #{tpu_custom_call.1} parent=1 // pred_check
      _
    $region39: #{tpu_custom_call.1} parent=1 // pred_check_branch
      %1900 = sbr.rel (0) target = $region41
    $region40: #{tpu_custom_call.1} parent=1 // pred_region
      %1901 = dma.done [#allocation3], 64
    $region41: #{tpu_custom_call.1} parent=1 // pred_fallthru
      _
    %1902 = vsyncpa [#allocation3], 1

</llo_original>
